<compile_context>
chip_gen: v7x
topology: tpu7x:2x2x1
jax: 0.10.0
libtpu: 0.0.40
codegen_flags: <defaults>
</compile_context>

<pallas_src>
import jax
import jax.numpy as jnp
from jax.experimental import pallas as pl
from jax.experimental.pallas import tpu as pltpu


def _make_lstm_kernel(T, B_pad, hidden_size, num_layers):
    H = hidden_size

    def kernel(x_ref, wih0_ref, whh0_ref, b0_ref,
               wih_r_ref, whh_r_ref, b_r_ref,
               wfc_ref, bfc_ref, out_ref):
        # x_ref: (T*B_pad, input_size), time-major: rows [t*B_pad:(t+1)*B_pad]
        # hold timestep t for the (padded) batch.

        def run_layer(xg_all, whh):
            """xg_all: (T*B_pad, 4H) = input projection (+bias) for all steps."""
            h = jnp.zeros((B_pad, H), jnp.float32)
            c = jnp.zeros((B_pad, H), jnp.float32)
            outs = []
            for t in range(T):                       # static unroll, T is small
                gates = xg_all[t * B_pad:(t + 1) * B_pad, :] + jnp.dot(
                    h, whh, preferred_element_type=jnp.float32)   # (B_pad, 4H)
                # Whole-vreg transcendentals (2 EUP pushes per cell).
                sig = jax.nn.sigmoid(gates)
                th = jnp.tanh(gates)
                i = sig[:, 0 * H:1 * H]
                f = sig[:, 1 * H:2 * H]
                g = th[:, 2 * H:3 * H]
                o = sig[:, 3 * H:4 * H]
                c = f * c + i * g
                h = o * jnp.tanh(c)
                outs.append(h)
            return outs, h

        # ---- layer 0: batched input projection over all timesteps ----------
        xg = jnp.dot(x_ref[...], wih0_ref[...],
                     preferred_element_type=jnp.float32) + b0_ref[...]
        outs, h_last = run_layer(xg, whh0_ref[...])

        # ---- layers 1 .. L-1 (layer-major; input proj batched over time) ---
        for l in range(num_layers - 1):
            inp_all = jnp.concatenate(outs, axis=0)            # (T*B_pad, H)
            xg = jnp.dot(inp_all, wih_r_ref[l],
                         preferred_element_type=jnp.float32) + b_r_ref[l]
            outs, h_last = run_layer(xg, whh_r_ref[l])

        # ---- final FC on the last timestep's top-layer hidden state --------
        out_ref[...] = (jnp.dot(h_last, wfc_ref[...],
                                preferred_element_type=jnp.float32)
                        + bfc_ref[...]).astype(out_ref.dtype)

    return kernel


def lstm_model_forward(x, params, num_layers):
    """x: (B, T, input_size) float32 -> (B, output_size) float32."""
    (wih0, whh0, b0, wih_r, whh_r, b_r, wfc, bfc) = params
    B, T, input_size = x.shape
    H = whh0.shape[0]
    output_size = wfc.shape[1]

    # Pad batch up to the sublane granule (8).
    B_pad = max(8, ((B + 7) // 8) * 8)
    x_p = jnp.zeros((B_pad, T, input_size), x.dtype).at[:B].set(x)
    # Time-major, flattened: row block [t*B_pad:(t+1)*B_pad] is timestep t.
    x_flat = jnp.transpose(x_p, (1, 0, 2)).reshape(T * B_pad, input_size)

    kernel = _make_lstm_kernel(T, B_pad, H, num_layers)
    vmem = pl.BlockSpec(memory_space=pltpu.MemorySpace.VMEM)

    out = pl.pallas_call(
        kernel,
        out_shape=jax.ShapeDtypeStruct((B_pad, output_size), jnp.float32),
        in_specs=[vmem] * 9,
        out_specs=vmem,
    )(x_flat, wih0, whh0, b0, wih_r, whh_r, b_r, wfc, bfc)
    return out[:B]


def init_params(key, input_size, hidden_size, num_layers, output_size):
    """PyTorch-style uniform(-1/sqrt(H), 1/sqrt(H)) init.

    Weights are stored transposed relative to PyTorch (kernel does x @ W) and
    the two LSTM biases (b_ih, b_hh) are summed (faithfully: sum of two
    independent uniforms).
    """
    H = hidden_size
    k = 1.0 / jnp.sqrt(jnp.float32(H))
    n_rest = max(num_layers - 1, 1)
    keys = jax.random.split(key, 10)
    u = lambda kk, shape: jax.random.uniform(kk, shape, jnp.float32, -k, k)

    wih0 = u(keys[0], (input_size, 4 * H))
    whh0 = u(keys[1], (H, 4 * H))
    b0 = u(keys[2], (1, 4 * H)) + u(keys[3], (1, 4 * H))          # b_ih + b_hh

    wih_r = u(keys[4], (n_rest, H, 4 * H))
    whh_r = u(keys[5], (n_rest, H, 4 * H))
    b_r = u(keys[6], (n_rest, 1, 4 * H)) + u(keys[7], (n_rest, 1, 4 * H))

    wfc = u(keys[8], (H, output_size))
    bfc = u(keys[9], (1, output_size))
    return (wih0, whh0, b0, wih_r, whh_r, b_r, wfc, bfc)


def reference_forward(x, params, num_layers):
    """Pure-JAX reference of the same math (PyTorch semantics), for checking."""
    (wih0, whh0, b0, wih_r, whh_r, b_r, wfc, bfc) = params
    B, T, _ = x.shape
    H = whh0.shape[0]
    h = [jnp.zeros((B, H), jnp.float32) for _ in range(num_layers)]
    c = [jnp.zeros((B, H), jnp.float32) for _ in range(num_layers)]

    def cell(inp, hl, cl, wih, whh, b):
        g = inp @ wih + hl @ whh + b
        i = jax.nn.sigmoid(g[:, 0 * H:1 * H])
        f = jax.nn.sigmoid(g[:, 1 * H:2 * H])
        gg = jnp.tanh(g[:, 2 * H:3 * H])
        o = jax.nn.sigmoid(g[:, 3 * H:4 * H])
        cn = f * cl + i * gg
        return o * jnp.tanh(cn), cn

    last = None
    for t in range(T):
        inp = x[:, t, :]
        h[0], c[0] = cell(inp, h[0], c[0], wih0, whh0, b0)
        inp = h[0]
        for l in range(num_layers - 1):
            h[l + 1], c[l + 1] = cell(inp, h[l + 1], c[l + 1],
                                      wih_r[l], whh_r[l], b_r[l])
            inp = h[l + 1]
        last = inp
    return last @ wfc + bfc


if __name__ == "__main__":
    # Small shapes consistent with the module's forward.
    batch, seq, input_size = 2, 8, 16
    hidden_size, num_layers, output_size = 32, 2, 4

    key = jax.random.PRNGKey(0)
    kx, kp = jax.random.split(key)
    x = jax.random.normal(kx, (batch, seq, input_size), jnp.float32)
    params = init_params(kp, input_size, hidden_size, num_layers, output_size)

    out = lstm_model_forward(x, params, num_layers)
    out = jax.block_until_ready(out)

    ref = reference_forward(x, params, num_layers)
    assert out.shape == (batch, output_size)
    assert jnp.allclose(out, ref, atol=1e-4, rtol=1e-4), (out, ref)

    print("KERNEL_OK")
</pallas_src>

<mosaic_0001>
module attributes {stable_mosaic.version = 11 : i64} {
  func.func @kernel(%arg0: memref<64x16xf32, #tpu.memory_space<vmem>>, %arg1: memref<16x128xf32, #tpu.memory_space<vmem>>, %arg2: memref<32x128xf32, #tpu.memory_space<vmem>>, %arg3: memref<1x128xf32, #tpu.memory_space<vmem>>, %arg4: memref<1x32x128xf32, #tpu.memory_space<vmem>>, %arg5: memref<1x32x128xf32, #tpu.memory_space<vmem>>, %arg6: memref<1x1x128xf32, #tpu.memory_space<vmem>>, %arg7: memref<32x4xf32, #tpu.memory_space<vmem>>, %arg8: memref<1x4xf32, #tpu.memory_space<vmem>>, %arg9: memref<8x4xf32, #tpu.memory_space<vmem>>) attributes {dimension_semantics = [], scalar_prefetch = 0 : i64, scratch_operands = 0 : i64, tpu.core_type = #tpu.core_type<tc>} {
    %c0 = arith.constant 0 : index
    %c0_0 = arith.constant 0 : index
    %0 = vector.load %arg0[%c0, %c0_0] : memref<64x16xf32, #tpu.memory_space<vmem>>, vector<64x16xf32>
    %c0_1 = arith.constant 0 : index
    %c0_2 = arith.constant 0 : index
    %1 = vector.load %arg1[%c0_1, %c0_2] : memref<16x128xf32, #tpu.memory_space<vmem>>, vector<16x128xf32>
    %cst = arith.constant dense<0.000000e+00> : vector<64x128xf32>
    %2 = tpu.matmul %0, %1, %cst {dimension_numbers = #tpu.dot_dimension_numbers<[1], [0], [0], [1], [0, 0, 1, 1], [], []>} : vector<64x16xf32>, vector<16x128xf32>, vector<64x128xf32> -> vector<64x128xf32>
    %c0_3 = arith.constant 0 : index
    %c0_4 = arith.constant 0 : index
    %3 = vector.load %arg3[%c0_3, %c0_4] : memref<1x128xf32, #tpu.memory_space<vmem>>, vector<1x128xf32>
    %4 = vector.broadcast %3 : vector<1x128xf32> to vector<64x128xf32>
    %5 = arith.addf %2, %4 : vector<64x128xf32>
    %c0_5 = arith.constant 0 : index
    %c0_6 = arith.constant 0 : index
    %6 = vector.load %arg2[%c0_5, %c0_6] : memref<32x128xf32, #tpu.memory_space<vmem>>, vector<32x128xf32>
    %cst_7 = arith.constant 0.000000e+00 : f32
    %7 = vector.broadcast %cst_7 : f32 to vector<8x32xf32>
    %cst_8 = arith.constant 0.000000e+00 : f32
    %8 = vector.broadcast %cst_8 : f32 to vector<8x32xf32>
    %9 = vector.extract_strided_slice %5 {offsets = [0, 0], sizes = [8, 128], strides = [1, 1]} : vector<64x128xf32> to vector<8x128xf32>
    %cst_9 = arith.constant dense<0.000000e+00> : vector<8x128xf32>
    %10 = tpu.matmul %7, %6, %cst_9 {dimension_numbers = #tpu.dot_dimension_numbers<[1], [0], [0], [1], [0, 0, 1, 1], [], []>} : vector<8x32xf32>, vector<32x128xf32>, vector<8x128xf32> -> vector<8x128xf32>
    %11 = arith.addf %9, %10 : vector<8x128xf32>
    %12 = arith.negf %11 : vector<8x128xf32>
    %13 = math.exp %12 : vector<8x128xf32>
    %cst_10 = arith.constant 1.000000e+00 : f32
    %14 = vector.broadcast %cst_10 : f32 to vector<8x128xf32>
    %15 = arith.addf %14, %13 : vector<8x128xf32>
    %16 = arith.divf %14, %15 : vector<8x128xf32>
    %17 = math.tanh %11 : vector<8x128xf32>
    %18 = vector.extract_strided_slice %16 {offsets = [0, 0], sizes = [8, 32], strides = [1, 1]} : vector<8x128xf32> to vector<8x32xf32>
    %19 = vector.extract_strided_slice %16 {offsets = [0, 32], sizes = [8, 32], strides = [1, 1]} : vector<8x128xf32> to vector<8x32xf32>
    %20 = vector.extract_strided_slice %17 {offsets = [0, 64], sizes = [8, 32], strides = [1, 1]} : vector<8x128xf32> to vector<8x32xf32>
    %21 = vector.extract_strided_slice %16 {offsets = [0, 96], sizes = [8, 32], strides = [1, 1]} : vector<8x128xf32> to vector<8x32xf32>
    %22 = arith.mulf %19, %8 : vector<8x32xf32>
    %23 = arith.mulf %18, %20 : vector<8x32xf32>
    %24 = arith.addf %22, %23 : vector<8x32xf32>
    %25 = math.tanh %24 : vector<8x32xf32>
    %26 = arith.mulf %21, %25 : vector<8x32xf32>
    %27 = vector.extract_strided_slice %5 {offsets = [8, 0], sizes = [8, 128], strides = [1, 1]} : vector<64x128xf32> to vector<8x128xf32>
    %cst_11 = arith.constant dense<0.000000e+00> : vector<8x128xf32>
    %28 = tpu.matmul %26, %6, %cst_11 {dimension_numbers = #tpu.dot_dimension_numbers<[1], [0], [0], [1], [0, 0, 1, 1], [], []>} : vector<8x32xf32>, vector<32x128xf32>, vector<8x128xf32> -> vector<8x128xf32>
    %29 = arith.addf %27, %28 : vector<8x128xf32>
    %30 = arith.negf %29 : vector<8x128xf32>
    %31 = math.exp %30 : vector<8x128xf32>
    %cst_12 = arith.constant 1.000000e+00 : f32
    %32 = vector.broadcast %cst_12 : f32 to vector<8x128xf32>
    %33 = arith.addf %32, %31 : vector<8x128xf32>
    %34 = arith.divf %32, %33 : vector<8x128xf32>
    %35 = math.tanh %29 : vector<8x128xf32>
    %36 = vector.extract_strided_slice %34 {offsets = [0, 0], sizes = [8, 32], strides = [1, 1]} : vector<8x128xf32> to vector<8x32xf32>
    %37 = vector.extract_strided_slice %34 {offsets = [0, 32], sizes = [8, 32], strides = [1, 1]} : vector<8x128xf32> to vector<8x32xf32>
    %38 = vector.extract_strided_slice %35 {offsets = [0, 64], sizes = [8, 32], strides = [1, 1]} : vector<8x128xf32> to vector<8x32xf32>
    %39 = vector.extract_strided_slice %34 {offsets = [0, 96], sizes = [8, 32], strides = [1, 1]} : vector<8x128xf32> to vector<8x32xf32>
    %40 = arith.mulf %37, %24 : vector<8x32xf32>
    %41 = arith.mulf %36, %38 : vector<8x32xf32>
    %42 = arith.addf %40, %41 : vector<8x32xf32>
    %43 = math.tanh %42 : vector<8x32xf32>
    %44 = arith.mulf %39, %43 : vector<8x32xf32>
    %45 = vector.extract_strided_slice %5 {offsets = [16, 0], sizes = [8, 128], strides = [1, 1]} : vector<64x128xf32> to vector<8x128xf32>
    %cst_13 = arith.constant dense<0.000000e+00> : vector<8x128xf32>
    %46 = tpu.matmul %44, %6, %cst_13 {dimension_numbers = #tpu.dot_dimension_numbers<[1], [0], [0], [1], [0, 0, 1, 1], [], []>} : vector<8x32xf32>, vector<32x128xf32>, vector<8x128xf32> -> vector<8x128xf32>
    %47 = arith.addf %45, %46 : vector<8x128xf32>
    %48 = arith.negf %47 : vector<8x128xf32>
    %49 = math.exp %48 : vector<8x128xf32>
    %cst_14 = arith.constant 1.000000e+00 : f32
    %50 = vector.broadcast %cst_14 : f32 to vector<8x128xf32>
    %51 = arith.addf %50, %49 : vector<8x128xf32>
    %52 = arith.divf %50, %51 : vector<8x128xf32>
    %53 = math.tanh %47 : vector<8x128xf32>
    %54 = vector.extract_strided_slice %52 {offsets = [0, 0], sizes = [8, 32], strides = [1, 1]} : vector<8x128xf32> to vector<8x32xf32>
    %55 = vector.extract_strided_slice %52 {offsets = [0, 32], sizes = [8, 32], strides = [1, 1]} : vector<8x128xf32> to vector<8x32xf32>
    %56 = vector.extract_strided_slice %53 {offsets = [0, 64], sizes = [8, 32], strides = [1, 1]} : vector<8x128xf32> to vector<8x32xf32>
    %57 = vector.extract_strided_slice %52 {offsets = [0, 96], sizes = [8, 32], strides = [1, 1]} : vector<8x128xf32> to vector<8x32xf32>
    %58 = arith.mulf %55, %42 : vector<8x32xf32>
    %59 = arith.mulf %54, %56 : vector<8x32xf32>
    %60 = arith.addf %58, %59 : vector<8x32xf32>
    %61 = math.tanh %60 : vector<8x32xf32>
    %62 = arith.mulf %57, %61 : vector<8x32xf32>
    %63 = vector.extract_strided_slice %5 {offsets = [24, 0], sizes = [8, 128], strides = [1, 1]} : vector<64x128xf32> to vector<8x128xf32>
    %cst_15 = arith.constant dense<0.000000e+00> : vector<8x128xf32>
    %64 = tpu.matmul %62, %6, %cst_15 {dimension_numbers = #tpu.dot_dimension_numbers<[1], [0], [0], [1], [0, 0, 1, 1], [], []>} : vector<8x32xf32>, vector<32x128xf32>, vector<8x128xf32> -> vector<8x128xf32>
    %65 = arith.addf %63, %64 : vector<8x128xf32>
    %66 = arith.negf %65 : vector<8x128xf32>
    %67 = math.exp %66 : vector<8x128xf32>
    %cst_16 = arith.constant 1.000000e+00 : f32
    %68 = vector.broadcast %cst_16 : f32 to vector<8x128xf32>
    %69 = arith.addf %68, %67 : vector<8x128xf32>
    %70 = arith.divf %68, %69 : vector<8x128xf32>
    %71 = math.tanh %65 : vector<8x128xf32>
    %72 = vector.extract_strided_slice %70 {offsets = [0, 0], sizes = [8, 32], strides = [1, 1]} : vector<8x128xf32> to vector<8x32xf32>
    %73 = vector.extract_strided_slice %70 {offsets = [0, 32], sizes = [8, 32], strides = [1, 1]} : vector<8x128xf32> to vector<8x32xf32>
    %74 = vector.extract_strided_slice %71 {offsets = [0, 64], sizes = [8, 32], strides = [1, 1]} : vector<8x128xf32> to vector<8x32xf32>
    %75 = vector.extract_strided_slice %70 {offsets = [0, 96], sizes = [8, 32], strides = [1, 1]} : vector<8x128xf32> to vector<8x32xf32>
    %76 = arith.mulf %73, %60 : vector<8x32xf32>
    %77 = arith.mulf %72, %74 : vector<8x32xf32>
    %78 = arith.addf %76, %77 : vector<8x32xf32>
    %79 = math.tanh %78 : vector<8x32xf32>
    %80 = arith.mulf %75, %79 : vector<8x32xf32>
    %81 = vector.extract_strided_slice %5 {offsets = [32, 0], sizes = [8, 128], strides = [1, 1]} : vector<64x128xf32> to vector<8x128xf32>
    %cst_17 = arith.constant dense<0.000000e+00> : vector<8x128xf32>
    %82 = tpu.matmul %80, %6, %cst_17 {dimension_numbers = #tpu.dot_dimension_numbers<[1], [0], [0], [1], [0, 0, 1, 1], [], []>} : vector<8x32xf32>, vector<32x128xf32>, vector<8x128xf32> -> vector<8x128xf32>
    %83 = arith.addf %81, %82 : vector<8x128xf32>
    %84 = arith.negf %83 : vector<8x128xf32>
    %85 = math.exp %84 : vector<8x128xf32>
    %cst_18 = arith.constant 1.000000e+00 : f32
    %86 = vector.broadcast %cst_18 : f32 to vector<8x128xf32>
    %87 = arith.addf %86, %85 : vector<8x128xf32>
    %88 = arith.divf %86, %87 : vector<8x128xf32>
    %89 = math.tanh %83 : vector<8x128xf32>
    %90 = vector.extract_strided_slice %88 {offsets = [0, 0], sizes = [8, 32], strides = [1, 1]} : vector<8x128xf32> to vector<8x32xf32>
    %91 = vector.extract_strided_slice %88 {offsets = [0, 32], sizes = [8, 32], strides = [1, 1]} : vector<8x128xf32> to vector<8x32xf32>
    %92 = vector.extract_strided_slice %89 {offsets = [0, 64], sizes = [8, 32], strides = [1, 1]} : vector<8x128xf32> to vector<8x32xf32>
    %93 = vector.extract_strided_slice %88 {offsets = [0, 96], sizes = [8, 32], strides = [1, 1]} : vector<8x128xf32> to vector<8x32xf32>
    %94 = arith.mulf %91, %78 : vector<8x32xf32>
    %95 = arith.mulf %90, %92 : vector<8x32xf32>
    %96 = arith.addf %94, %95 : vector<8x32xf32>
    %97 = math.tanh %96 : vector<8x32xf32>
    %98 = arith.mulf %93, %97 : vector<8x32xf32>
    %99 = vector.extract_strided_slice %5 {offsets = [40, 0], sizes = [8, 128], strides = [1, 1]} : vector<64x128xf32> to vector<8x128xf32>
    %cst_19 = arith.constant dense<0.000000e+00> : vector<8x128xf32>
    %100 = tpu.matmul %98, %6, %cst_19 {dimension_numbers = #tpu.dot_dimension_numbers<[1], [0], [0], [1], [0, 0, 1, 1], [], []>} : vector<8x32xf32>, vector<32x128xf32>, vector<8x128xf32> -> vector<8x128xf32>
    %101 = arith.addf %99, %100 : vector<8x128xf32>
    %102 = arith.negf %101 : vector<8x128xf32>
    %103 = math.exp %102 : vector<8x128xf32>
    %cst_20 = arith.constant 1.000000e+00 : f32
    %104 = vector.broadcast %cst_20 : f32 to vector<8x128xf32>
    %105 = arith.addf %104, %103 : vector<8x128xf32>
    %106 = arith.divf %104, %105 : vector<8x128xf32>
    %107 = math.tanh %101 : vector<8x128xf32>
    %108 = vector.extract_strided_slice %106 {offsets = [0, 0], sizes = [8, 32], strides = [1, 1]} : vector<8x128xf32> to vector<8x32xf32>
    %109 = vector.extract_strided_slice %106 {offsets = [0, 32], sizes = [8, 32], strides = [1, 1]} : vector<8x128xf32> to vector<8x32xf32>
    %110 = vector.extract_strided_slice %107 {offsets = [0, 64], sizes = [8, 32], strides = [1, 1]} : vector<8x128xf32> to vector<8x32xf32>
    %111 = vector.extract_strided_slice %106 {offsets = [0, 96], sizes = [8, 32], strides = [1, 1]} : vector<8x128xf32> to vector<8x32xf32>
    %112 = arith.mulf %109, %96 : vector<8x32xf32>
    %113 = arith.mulf %108, %110 : vector<8x32xf32>
    %114 = arith.addf %112, %113 : vector<8x32xf32>
    %115 = math.tanh %114 : vector<8x32xf32>
    %116 = arith.mulf %111, %115 : vector<8x32xf32>
    %117 = vector.extract_strided_slice %5 {offsets = [48, 0], sizes = [8, 128], strides = [1, 1]} : vector<64x128xf32> to vector<8x128xf32>
    %cst_21 = arith.constant dense<0.000000e+00> : vector<8x128xf32>
    %118 = tpu.matmul %116, %6, %cst_21 {dimension_numbers = #tpu.dot_dimension_numbers<[1], [0], [0], [1], [0, 0, 1, 1], [], []>} : vector<8x32xf32>, vector<32x128xf32>, vector<8x128xf32> -> vector<8x128xf32>
    %119 = arith.addf %117, %118 : vector<8x128xf32>
    %120 = arith.negf %119 : vector<8x128xf32>
    %121 = math.exp %120 : vector<8x128xf32>
    %cst_22 = arith.constant 1.000000e+00 : f32
    %122 = vector.broadcast %cst_22 : f32 to vector<8x128xf32>
    %123 = arith.addf %122, %121 : vector<8x128xf32>
    %124 = arith.divf %122, %123 : vector<8x128xf32>
    %125 = math.tanh %119 : vector<8x128xf32>
    %126 = vector.extract_strided_slice %124 {offsets = [0, 0], sizes = [8, 32], strides = [1, 1]} : vector<8x128xf32> to vector<8x32xf32>
    %127 = vector.extract_strided_slice %124 {offsets = [0, 32], sizes = [8, 32], strides = [1, 1]} : vector<8x128xf32> to vector<8x32xf32>
    %128 = vector.extract_strided_slice %125 {offsets = [0, 64], sizes = [8, 32], strides = [1, 1]} : vector<8x128xf32> to vector<8x32xf32>
    %129 = vector.extract_strided_slice %124 {offsets = [0, 96], sizes = [8, 32], strides = [1, 1]} : vector<8x128xf32> to vector<8x32xf32>
    %130 = arith.mulf %127, %114 : vector<8x32xf32>
    %131 = arith.mulf %126, %128 : vector<8x32xf32>
    %132 = arith.addf %130, %131 : vector<8x32xf32>
    %133 = math.tanh %132 : vector<8x32xf32>
    %134 = arith.mulf %129, %133 : vector<8x32xf32>
    %135 = vector.extract_strided_slice %5 {offsets = [56, 0], sizes = [8, 128], strides = [1, 1]} : vector<64x128xf32> to vector<8x128xf32>
    %cst_23 = arith.constant dense<0.000000e+00> : vector<8x128xf32>
    %136 = tpu.matmul %134, %6, %cst_23 {dimension_numbers = #tpu.dot_dimension_numbers<[1], [0], [0], [1], [0, 0, 1, 1], [], []>} : vector<8x32xf32>, vector<32x128xf32>, vector<8x128xf32> -> vector<8x128xf32>
    %137 = arith.addf %135, %136 : vector<8x128xf32>
    %138 = arith.negf %137 : vector<8x128xf32>
    %139 = math.exp %138 : vector<8x128xf32>
    %cst_24 = arith.constant 1.000000e+00 : f32
    %140 = vector.broadcast %cst_24 : f32 to vector<8x128xf32>
    %141 = arith.addf %140, %139 : vector<8x128xf32>
    %142 = arith.divf %140, %141 : vector<8x128xf32>
    %143 = math.tanh %137 : vector<8x128xf32>
    %144 = vector.extract_strided_slice %142 {offsets = [0, 0], sizes = [8, 32], strides = [1, 1]} : vector<8x128xf32> to vector<8x32xf32>
    %145 = vector.extract_strided_slice %142 {offsets = [0, 32], sizes = [8, 32], strides = [1, 1]} : vector<8x128xf32> to vector<8x32xf32>
    %146 = vector.extract_strided_slice %143 {offsets = [0, 64], sizes = [8, 32], strides = [1, 1]} : vector<8x128xf32> to vector<8x32xf32>
    %147 = vector.extract_strided_slice %142 {offsets = [0, 96], sizes = [8, 32], strides = [1, 1]} : vector<8x128xf32> to vector<8x32xf32>
    %148 = arith.mulf %145, %132 : vector<8x32xf32>
    %149 = arith.mulf %144, %146 : vector<8x32xf32>
    %150 = arith.addf %148, %149 : vector<8x32xf32>
    %151 = math.tanh %150 : vector<8x32xf32>
    %152 = arith.mulf %147, %151 : vector<8x32xf32>
    %153 = tpu.concatenate %26, %44, %62, %80, %98, %116, %134, %152 in 0 : vector<8x32xf32>, vector<8x32xf32>, vector<8x32xf32>, vector<8x32xf32>, vector<8x32xf32>, vector<8x32xf32>, vector<8x32xf32>, vector<8x32xf32> -> vector<64x32xf32>
    %c0_25 = arith.constant 0 : index
    %c0_26 = arith.constant 0 : index
    %c0_27 = arith.constant 0 : index
    %154 = vector.load %arg4[%c0_25, %c0_26, %c0_27] : memref<1x32x128xf32, #tpu.memory_space<vmem>>, vector<1x32x128xf32>
    %155 = vector.shape_cast %154 : vector<1x32x128xf32> to vector<32x128xf32>
    %cst_28 = arith.constant dense<0.000000e+00> : vector<64x128xf32>
    %156 = tpu.matmul %153, %155, %cst_28 {dimension_numbers = #tpu.dot_dimension_numbers<[1], [0], [0], [1], [0, 0, 1, 1], [], []>} : vector<64x32xf32>, vector<32x128xf32>, vector<64x128xf32> -> vector<64x128xf32>
    %c0_29 = arith.constant 0 : index
    %c0_30 = arith.constant 0 : index
    %c0_31 = arith.constant 0 : index
    %157 = vector.load %arg6[%c0_29, %c0_30, %c0_31] : memref<1x1x128xf32, #tpu.memory_space<vmem>>, vector<1x1x128xf32>
    %158 = vector.shape_cast %157 : vector<1x1x128xf32> to vector<1x128xf32>
    %159 = vector.broadcast %158 : vector<1x128xf32> to vector<64x128xf32>
    %160 = arith.addf %156, %159 : vector<64x128xf32>
    %c0_32 = arith.constant 0 : index
    %c0_33 = arith.constant 0 : index
    %c0_34 = arith.constant 0 : index
    %161 = vector.load %arg5[%c0_32, %c0_33, %c0_34] : memref<1x32x128xf32, #tpu.memory_space<vmem>>, vector<1x32x128xf32>
    %162 = vector.shape_cast %161 : vector<1x32x128xf32> to vector<32x128xf32>
    %cst_35 = arith.constant 0.000000e+00 : f32
    %163 = vector.broadcast %cst_35 : f32 to vector<8x32xf32>
    %cst_36 = arith.constant 0.000000e+00 : f32
    %164 = vector.broadcast %cst_36 : f32 to vector<8x32xf32>
    %165 = vector.extract_strided_slice %160 {offsets = [0, 0], sizes = [8, 128], strides = [1, 1]} : vector<64x128xf32> to vector<8x128xf32>
    %cst_37 = arith.constant dense<0.000000e+00> : vector<8x128xf32>
    %166 = tpu.matmul %163, %162, %cst_37 {dimension_numbers = #tpu.dot_dimension_numbers<[1], [0], [0], [1], [0, 0, 1, 1], [], []>} : vector<8x32xf32>, vector<32x128xf32>, vector<8x128xf32> -> vector<8x128xf32>
    %167 = arith.addf %165, %166 : vector<8x128xf32>
    %168 = arith.negf %167 : vector<8x128xf32>
    %169 = math.exp %168 : vector<8x128xf32>
    %cst_38 = arith.constant 1.000000e+00 : f32
    %170 = vector.broadcast %cst_38 : f32 to vector<8x128xf32>
    %171 = arith.addf %170, %169 : vector<8x128xf32>
    %172 = arith.divf %170, %171 : vector<8x128xf32>
    %173 = math.tanh %167 : vector<8x128xf32>
    %174 = vector.extract_strided_slice %172 {offsets = [0, 0], sizes = [8, 32], strides = [1, 1]} : vector<8x128xf32> to vector<8x32xf32>
    %175 = vector.extract_strided_slice %172 {offsets = [0, 32], sizes = [8, 32], strides = [1, 1]} : vector<8x128xf32> to vector<8x32xf32>
    %176 = vector.extract_strided_slice %173 {offsets = [0, 64], sizes = [8, 32], strides = [1, 1]} : vector<8x128xf32> to vector<8x32xf32>
    %177 = vector.extract_strided_slice %172 {offsets = [0, 96], sizes = [8, 32], strides = [1, 1]} : vector<8x128xf32> to vector<8x32xf32>
    %178 = arith.mulf %175, %164 : vector<8x32xf32>
    %179 = arith.mulf %174, %176 : vector<8x32xf32>
    %180 = arith.addf %178, %179 : vector<8x32xf32>
    %181 = math.tanh %180 : vector<8x32xf32>
    %182 = arith.mulf %177, %181 : vector<8x32xf32>
    %183 = vector.extract_strided_slice %160 {offsets = [8, 0], sizes = [8, 128], strides = [1, 1]} : vector<64x128xf32> to vector<8x128xf32>
    %cst_39 = arith.constant dense<0.000000e+00> : vector<8x128xf32>
    %184 = tpu.matmul %182, %162, %cst_39 {dimension_numbers = #tpu.dot_dimension_numbers<[1], [0], [0], [1], [0, 0, 1, 1], [], []>} : vector<8x32xf32>, vector<32x128xf32>, vector<8x128xf32> -> vector<8x128xf32>
    %185 = arith.addf %183, %184 : vector<8x128xf32>
    %186 = arith.negf %185 : vector<8x128xf32>
    %187 = math.exp %186 : vector<8x128xf32>
    %cst_40 = arith.constant 1.000000e+00 : f32
    %188 = vector.broadcast %cst_40 : f32 to vector<8x128xf32>
    %189 = arith.addf %188, %187 : vector<8x128xf32>
    %190 = arith.divf %188, %189 : vector<8x128xf32>
    %191 = math.tanh %185 : vector<8x128xf32>
    %192 = vector.extract_strided_slice %190 {offsets = [0, 0], sizes = [8, 32], strides = [1, 1]} : vector<8x128xf32> to vector<8x32xf32>
    %193 = vector.extract_strided_slice %190 {offsets = [0, 32], sizes = [8, 32], strides = [1, 1]} : vector<8x128xf32> to vector<8x32xf32>
    %194 = vector.extract_strided_slice %191 {offsets = [0, 64], sizes = [8, 32], strides = [1, 1]} : vector<8x128xf32> to vector<8x32xf32>
    %195 = vector.extract_strided_slice %190 {offsets = [0, 96], sizes = [8, 32], strides = [1, 1]} : vector<8x128xf32> to vector<8x32xf32>
    %196 = arith.mulf %193, %180 : vector<8x32xf32>
    %197 = arith.mulf %192, %194 : vector<8x32xf32>
    %198 = arith.addf %196, %197 : vector<8x32xf32>
    %199 = math.tanh %198 : vector<8x32xf32>
    %200 = arith.mulf %195, %199 : vector<8x32xf32>
    %201 = vector.extract_strided_slice %160 {offsets = [16, 0], sizes = [8, 128], strides = [1, 1]} : vector<64x128xf32> to vector<8x128xf32>
    %cst_41 = arith.constant dense<0.000000e+00> : vector<8x128xf32>
    %202 = tpu.matmul %200, %162, %cst_41 {dimension_numbers = #tpu.dot_dimension_numbers<[1], [0], [0], [1], [0, 0, 1, 1], [], []>} : vector<8x32xf32>, vector<32x128xf32>, vector<8x128xf32> -> vector<8x128xf32>
    %203 = arith.addf %201, %202 : vector<8x128xf32>
    %204 = arith.negf %203 : vector<8x128xf32>
    %205 = math.exp %204 : vector<8x128xf32>
    %cst_42 = arith.constant 1.000000e+00 : f32
    %206 = vector.broadcast %cst_42 : f32 to vector<8x128xf32>
    %207 = arith.addf %206, %205 : vector<8x128xf32>
    %208 = arith.divf %206, %207 : vector<8x128xf32>
    %209 = math.tanh %203 : vector<8x128xf32>
    %210 = vector.extract_strided_slice %208 {offsets = [0, 0], sizes = [8, 32], strides = [1, 1]} : vector<8x128xf32> to vector<8x32xf32>
    %211 = vector.extract_strided_slice %208 {offsets = [0, 32], sizes = [8, 32], strides = [1, 1]} : vector<8x128xf32> to vector<8x32xf32>
    %212 = vector.extract_strided_slice %209 {offsets = [0, 64], sizes = [8, 32], strides = [1, 1]} : vector<8x128xf32> to vector<8x32xf32>
    %213 = vector.extract_strided_slice %208 {offsets = [0, 96], sizes = [8, 32], strides = [1, 1]} : vector<8x128xf32> to vector<8x32xf32>
    %214 = arith.mulf %211, %198 : vector<8x32xf32>
    %215 = arith.mulf %210, %212 : vector<8x32xf32>
    %216 = arith.addf %214, %215 : vector<8x32xf32>
    %217 = math.tanh %216 : vector<8x32xf32>
    %218 = arith.mulf %213, %217 : vector<8x32xf32>
    %219 = vector.extract_strided_slice %160 {offsets = [24, 0], sizes = [8, 128], strides = [1, 1]} : vector<64x128xf32> to vector<8x128xf32>
    %cst_43 = arith.constant dense<0.000000e+00> : vector<8x128xf32>
    %220 = tpu.matmul %218, %162, %cst_43 {dimension_numbers = #tpu.dot_dimension_numbers<[1], [0], [0], [1], [0, 0, 1, 1], [], []>} : vector<8x32xf32>, vector<32x128xf32>, vector<8x128xf32> -> vector<8x128xf32>
    %221 = arith.addf %219, %220 : vector<8x128xf32>
    %222 = arith.negf %221 : vector<8x128xf32>
    %223 = math.exp %222 : vector<8x128xf32>
    %cst_44 = arith.constant 1.000000e+00 : f32
    %224 = vector.broadcast %cst_44 : f32 to vector<8x128xf32>
    %225 = arith.addf %224, %223 : vector<8x128xf32>
    %226 = arith.divf %224, %225 : vector<8x128xf32>
    %227 = math.tanh %221 : vector<8x128xf32>
    %228 = vector.extract_strided_slice %226 {offsets = [0, 0], sizes = [8, 32], strides = [1, 1]} : vector<8x128xf32> to vector<8x32xf32>
    %229 = vector.extract_strided_slice %226 {offsets = [0, 32], sizes = [8, 32], strides = [1, 1]} : vector<8x128xf32> to vector<8x32xf32>
    %230 = vector.extract_strided_slice %227 {offsets = [0, 64], sizes = [8, 32], strides = [1, 1]} : vector<8x128xf32> to vector<8x32xf32>
    %231 = vector.extract_strided_slice %226 {offsets = [0, 96], sizes = [8, 32], strides = [1, 1]} : vector<8x128xf32> to vector<8x32xf32>
    %232 = arith.mulf %229, %216 : vector<8x32xf32>
    %233 = arith.mulf %228, %230 : vector<8x32xf32>
    %234 = arith.addf %232, %233 : vector<8x32xf32>
    %235 = math.tanh %234 : vector<8x32xf32>
    %236 = arith.mulf %231, %235 : vector<8x32xf32>
    %237 = vector.extract_strided_slice %160 {offsets = [32, 0], sizes = [8, 128], strides = [1, 1]} : vector<64x128xf32> to vector<8x128xf32>
    %cst_45 = arith.constant dense<0.000000e+00> : vector<8x128xf32>
    %238 = tpu.matmul %236, %162, %cst_45 {dimension_numbers = #tpu.dot_dimension_numbers<[1], [0], [0], [1], [0, 0, 1, 1], [], []>} : vector<8x32xf32>, vector<32x128xf32>, vector<8x128xf32> -> vector<8x128xf32>
    %239 = arith.addf %237, %238 : vector<8x128xf32>
    %240 = arith.negf %239 : vector<8x128xf32>
    %241 = math.exp %240 : vector<8x128xf32>
    %cst_46 = arith.constant 1.000000e+00 : f32
    %242 = vector.broadcast %cst_46 : f32 to vector<8x128xf32>
    %243 = arith.addf %242, %241 : vector<8x128xf32>
    %244 = arith.divf %242, %243 : vector<8x128xf32>
    %245 = math.tanh %239 : vector<8x128xf32>
    %246 = vector.extract_strided_slice %244 {offsets = [0, 0], sizes = [8, 32], strides = [1, 1]} : vector<8x128xf32> to vector<8x32xf32>
    %247 = vector.extract_strided_slice %244 {offsets = [0, 32], sizes = [8, 32], strides = [1, 1]} : vector<8x128xf32> to vector<8x32xf32>
    %248 = vector.extract_strided_slice %245 {offsets = [0, 64], sizes = [8, 32], strides = [1, 1]} : vector<8x128xf32> to vector<8x32xf32>
    %249 = vector.extract_strided_slice %244 {offsets = [0, 96], sizes = [8, 32], strides = [1, 1]} : vector<8x128xf32> to vector<8x32xf32>
    %250 = arith.mulf %247, %234 : vector<8x32xf32>
    %251 = arith.mulf %246, %248 : vector<8x32xf32>
    %252 = arith.addf %250, %251 : vector<8x32xf32>
    %253 = math.tanh %252 : vector<8x32xf32>
    %254 = arith.mulf %249, %253 : vector<8x32xf32>
    %255 = vector.extract_strided_slice %160 {offsets = [40, 0], sizes = [8, 128], strides = [1, 1]} : vector<64x128xf32> to vector<8x128xf32>
    %cst_47 = arith.constant dense<0.000000e+00> : vector<8x128xf32>
    %256 = tpu.matmul %254, %162, %cst_47 {dimension_numbers = #tpu.dot_dimension_numbers<[1], [0], [0], [1], [0, 0, 1, 1], [], []>} : vector<8x32xf32>, vector<32x128xf32>, vector<8x128xf32> -> vector<8x128xf32>
    %257 = arith.addf %255, %256 : vector<8x128xf32>
    %258 = arith.negf %257 : vector<8x128xf32>
    %259 = math.exp %258 : vector<8x128xf32>
    %cst_48 = arith.constant 1.000000e+00 : f32
    %260 = vector.broadcast %cst_48 : f32 to vector<8x128xf32>
    %261 = arith.addf %260, %259 : vector<8x128xf32>
    %262 = arith.divf %260, %261 : vector<8x128xf32>
    %263 = math.tanh %257 : vector<8x128xf32>
    %264 = vector.extract_strided_slice %262 {offsets = [0, 0], sizes = [8, 32], strides = [1, 1]} : vector<8x128xf32> to vector<8x32xf32>
    %265 = vector.extract_strided_slice %262 {offsets = [0, 32], sizes = [8, 32], strides = [1, 1]} : vector<8x128xf32> to vector<8x32xf32>
    %266 = vector.extract_strided_slice %263 {offsets = [0, 64], sizes = [8, 32], strides = [1, 1]} : vector<8x128xf32> to vector<8x32xf32>
    %267 = vector.extract_strided_slice %262 {offsets = [0, 96], sizes = [8, 32], strides = [1, 1]} : vector<8x128xf32> to vector<8x32xf32>
    %268 = arith.mulf %265, %252 : vector<8x32xf32>
    %269 = arith.mulf %264, %266 : vector<8x32xf32>
    %270 = arith.addf %268, %269 : vector<8x32xf32>
    %271 = math.tanh %270 : vector<8x32xf32>
    %272 = arith.mulf %267, %271 : vector<8x32xf32>
    %273 = vector.extract_strided_slice %160 {offsets = [48, 0], sizes = [8, 128], strides = [1, 1]} : vector<64x128xf32> to vector<8x128xf32>
    %cst_49 = arith.constant dense<0.000000e+00> : vector<8x128xf32>
    %274 = tpu.matmul %272, %162, %cst_49 {dimension_numbers = #tpu.dot_dimension_numbers<[1], [0], [0], [1], [0, 0, 1, 1], [], []>} : vector<8x32xf32>, vector<32x128xf32>, vector<8x128xf32> -> vector<8x128xf32>
    %275 = arith.addf %273, %274 : vector<8x128xf32>
    %276 = arith.negf %275 : vector<8x128xf32>
    %277 = math.exp %276 : vector<8x128xf32>
    %cst_50 = arith.constant 1.000000e+00 : f32
    %278 = vector.broadcast %cst_50 : f32 to vector<8x128xf32>
    %279 = arith.addf %278, %277 : vector<8x128xf32>
    %280 = arith.divf %278, %279 : vector<8x128xf32>
    %281 = math.tanh %275 : vector<8x128xf32>
    %282 = vector.extract_strided_slice %280 {offsets = [0, 0], sizes = [8, 32], strides = [1, 1]} : vector<8x128xf32> to vector<8x32xf32>
    %283 = vector.extract_strided_slice %280 {offsets = [0, 32], sizes = [8, 32], strides = [1, 1]} : vector<8x128xf32> to vector<8x32xf32>
    %284 = vector.extract_strided_slice %281 {offsets = [0, 64], sizes = [8, 32], strides = [1, 1]} : vector<8x128xf32> to vector<8x32xf32>
    %285 = vector.extract_strided_slice %280 {offsets = [0, 96], sizes = [8, 32], strides = [1, 1]} : vector<8x128xf32> to vector<8x32xf32>
    %286 = arith.mulf %283, %270 : vector<8x32xf32>
    %287 = arith.mulf %282, %284 : vector<8x32xf32>
    %288 = arith.addf %286, %287 : vector<8x32xf32>
    %289 = math.tanh %288 : vector<8x32xf32>
    %290 = arith.mulf %285, %289 : vector<8x32xf32>
    %291 = vector.extract_strided_slice %160 {offsets = [56, 0], sizes = [8, 128], strides = [1, 1]} : vector<64x128xf32> to vector<8x128xf32>
    %cst_51 = arith.constant dense<0.000000e+00> : vector<8x128xf32>
    %292 = tpu.matmul %290, %162, %cst_51 {dimension_numbers = #tpu.dot_dimension_numbers<[1], [0], [0], [1], [0, 0, 1, 1], [], []>} : vector<8x32xf32>, vector<32x128xf32>, vector<8x128xf32> -> vector<8x128xf32>
    %293 = arith.addf %291, %292 : vector<8x128xf32>
    %294 = arith.negf %293 : vector<8x128xf32>
    %295 = math.exp %294 : vector<8x128xf32>
    %cst_52 = arith.constant 1.000000e+00 : f32
    %296 = vector.broadcast %cst_52 : f32 to vector<8x128xf32>
    %297 = arith.addf %296, %295 : vector<8x128xf32>
    %298 = arith.divf %296, %297 : vector<8x128xf32>
    %299 = math.tanh %293 : vector<8x128xf32>
    %300 = vector.extract_strided_slice %298 {offsets = [0, 0], sizes = [8, 32], strides = [1, 1]} : vector<8x128xf32> to vector<8x32xf32>
    %301 = vector.extract_strided_slice %298 {offsets = [0, 32], sizes = [8, 32], strides = [1, 1]} : vector<8x128xf32> to vector<8x32xf32>
    %302 = vector.extract_strided_slice %299 {offsets = [0, 64], sizes = [8, 32], strides = [1, 1]} : vector<8x128xf32> to vector<8x32xf32>
    %303 = vector.extract_strided_slice %298 {offsets = [0, 96], sizes = [8, 32], strides = [1, 1]} : vector<8x128xf32> to vector<8x32xf32>
    %304 = arith.mulf %301, %288 : vector<8x32xf32>
    %305 = arith.mulf %300, %302 : vector<8x32xf32>
    %306 = arith.addf %304, %305 : vector<8x32xf32>
    %307 = math.tanh %306 : vector<8x32xf32>
    %308 = arith.mulf %303, %307 : vector<8x32xf32>
    %c0_53 = arith.constant 0 : index
    %c0_54 = arith.constant 0 : index
    %309 = vector.load %arg7[%c0_53, %c0_54] : memref<32x4xf32, #tpu.memory_space<vmem>>, vector<32x4xf32>
    %cst_55 = arith.constant dense<0.000000e+00> : vector<8x4xf32>
    %310 = tpu.matmul %308, %309, %cst_55 {dimension_numbers = #tpu.dot_dimension_numbers<[1], [0], [0], [1], [0, 0, 1, 1], [], []>} : vector<8x32xf32>, vector<32x4xf32>, vector<8x4xf32> -> vector<8x4xf32>
    %c0_56 = arith.constant 0 : index
    %c0_57 = arith.constant 0 : index
    %311 = vector.load %arg8[%c0_56, %c0_57] : memref<1x4xf32, #tpu.memory_space<vmem>>, vector<1x4xf32>
    %312 = vector.broadcast %311 : vector<1x4xf32> to vector<8x4xf32>
    %313 = arith.addf %310, %312 : vector<8x4xf32>
    %c0_58 = arith.constant 0 : index
    %c0_59 = arith.constant 0 : index
    %314 = vector.load %arg9[%c0_58, %c0_59] : memref<8x4xf32, #tpu.memory_space<vmem>>, vector<8x4xf32>
    tpu.vector_store %arg9[%c0_58, %c0_59], %313 {strides = array<i32>} : memref<8x4xf32, #tpu.memory_space<vmem>>, vector<8x4xf32>,
    return
  }
}

</mosaic_0001>

<llo_original>
// kernel: tpu_custom_call.1
$region0: #{tpu_custom_call.1}
  #allocation0 [shape = 'u32[]', space=smem, size = 0x4, offset = 0x4, fixed_abs, tag = 'smem constant byte address 0x4 - core index']
  #allocation1 [shape = 'u32[144,128]{1,0:T(1,128)}', space=vmem, size = 0x12000, scoped, tag = 'internal scratch']
  %s0 = inlined_call_operand.vmem [shape: f32[64,16], index: 0, kind: input, shape index: {}]
  %s1 = inlined_call_operand.vmem [shape: f32[16,128], index: 1, kind: input, shape index: {}]
  %s2 = inlined_call_operand.vmem [shape: f32[32,128], index: 2, kind: input, shape index: {}]
  %s3 = inlined_call_operand.vmem [shape: f32[1,128], index: 3, kind: input, shape index: {}]
  %s4 = inlined_call_operand.vmem [shape: f32[1,32,128], index: 4, kind: input, shape index: {}]
  %s5 = inlined_call_operand.vmem [shape: f32[1,32,128], index: 5, kind: input, shape index: {}]
  %s6 = inlined_call_operand.vmem [shape: f32[1,1,128], index: 6, kind: input, shape index: {}]
  %s7 = inlined_call_operand.vmem [shape: f32[32,4], index: 7, kind: input, shape index: {}]
  %s8 = inlined_call_operand.vmem [shape: f32[1,4], index: 8, kind: input, shape index: {}]
  %s9 = inlined_call_operand.vmem [shape: f32[8,4], index: 9, kind: output, shape index: {}]
  %s10 = sld [smem:[#allocation0]]
  $region46: #{tpu_custom_call.1} parent=0
    _
  %s12 = ssub.s32 1, %s10
  %s13 = scalar_select 0, %s12, %s10
  // Predicated region
  $region2: #{tpu_custom_call.1} parent=0 // pred_check
    _
  $region3: #{tpu_custom_call.1} parent=0 // pred_check_branch
    %15 = sbr.rel (0) target = $region5
  $region4: #{tpu_custom_call.1} parent=0 // pred_region
    _
  $region5: #{tpu_custom_call.1} parent=0 // pred_fallthru
    _
  // Predicated region
  $region6: #{tpu_custom_call.1} parent=0 // pred_check
    _
  $region7: #{tpu_custom_call.1} parent=0 // pred_check_branch
    %17 = sbr.rel (0) target = $region9
  $region8: #{tpu_custom_call.1} parent=0 // pred_region
    _
  $region9: #{tpu_custom_call.1} parent=0 // pred_fallthru
    _
  // Predicated region
  $region10: #{tpu_custom_call.1} parent=0 // pred_check
    _
  $region11: #{tpu_custom_call.1} parent=0 // pred_check_branch
    %19 = sbr.rel (0) target = $region13
  $region12: #{tpu_custom_call.1} parent=0 // pred_region
    _
  $region13: #{tpu_custom_call.1} parent=0 // pred_fallthru
    _
  // Predicated region
  $region14: #{tpu_custom_call.1} parent=0 // pred_check
    _
  $region15: #{tpu_custom_call.1} parent=0 // pred_check_branch
    %21 = sbr.rel (0) target = $region17
  $region16: #{tpu_custom_call.1} parent=0 // pred_region
    _
  $region17: #{tpu_custom_call.1} parent=0 // pred_fallthru
    _
  // Predicated region
  $region18: #{tpu_custom_call.1} parent=0 // pred_check
    _
  $region19: #{tpu_custom_call.1} parent=0 // pred_check_branch
    %23 = sbr.rel (0) target = $region21
  $region20: #{tpu_custom_call.1} parent=0 // pred_region
    _
  $region21: #{tpu_custom_call.1} parent=0 // pred_fallthru
    _
  // Predicated region
  $region22: #{tpu_custom_call.1} parent=0 // pred_check
    _
  $region23: #{tpu_custom_call.1} parent=0 // pred_check_branch
    %25 = sbr.rel (0) target = $region25
  $region24: #{tpu_custom_call.1} parent=0 // pred_region
    _
  $region25: #{tpu_custom_call.1} parent=0 // pred_fallthru
    _
  // Predicated region
  $region26: #{tpu_custom_call.1} parent=0 // pred_check
    _
  $region27: #{tpu_custom_call.1} parent=0 // pred_check_branch
    %27 = sbr.rel (0) target = $region29
  $region28: #{tpu_custom_call.1} parent=0 // pred_region
    _
  $region29: #{tpu_custom_call.1} parent=0 // pred_fallthru
    _
  // Predicated region
  $region30: #{tpu_custom_call.1} parent=0 // pred_check
    _
  $region31: #{tpu_custom_call.1} parent=0 // pred_check_branch
    %29 = sbr.rel (0) target = $region33
  $region32: #{tpu_custom_call.1} parent=0 // pred_region
    _
  $region33: #{tpu_custom_call.1} parent=0 // pred_fallthru
    _
  // Predicated region
  $region34: #{tpu_custom_call.1} parent=0 // pred_check
    _
  $region35: #{tpu_custom_call.1} parent=0 // pred_check_branch
    %31 = sbr.rel (0) target = $region37
  $region36: #{tpu_custom_call.1} parent=0 // pred_region
    _
  $region37: #{tpu_custom_call.1} parent=0 // pred_fallthru
    _
  %v32 = vld [vmem:[%s0] sm:$0xff]
  %v33 = vld [vmem:[%s0 + $0x8] sm:$0xff]
  %v34 = vld [vmem:[%s0 + $0x10] sm:$0xff]
  %v35 = vld [vmem:[%s0 + $0x18] sm:$0xff]
  %v36 = vld [vmem:[%s0 + $0x20] sm:$0xff]
  %v37 = vld [vmem:[%s0 + $0x28] sm:$0xff]
  %v38 = vld [vmem:[%s0 + $0x30] sm:$0xff]
  %v39 = vld [vmem:[%s0 + $0x38] sm:$0xff]
  %v40 = vld [vmem:[%s1] sm:$0xff]
  %v41 = vld [vmem:[%s1 + $0x8] sm:$0xff]
  %v42 = vld [vmem:[%s3] sm:$0x1]
  %v44 = vlaneseq
  %v45 = vshrl.u32 %v44, 7
  %v46 = vsub.s32 0, %v45
  %v47 = vrot.slane %v42, %v46
  %vm49 = vcmask 130048
  %v51 = vsel %vm49, %v32, 0
  %v54 = vsel %vm49, %v33, 0
  %v57 = vsel %vm49, %v34, 0
  %v60 = vsel %vm49, %v35, 0
  %v63 = vsel %vm49, %v36, 0
  %v66 = vsel %vm49, %v37, 0
  %v69 = vsel %vm49, %v38, 0
  %v72 = vsel %vm49, %v39, 0
  %74 = vmatprep.subr.mxu0 0.0
  %75 = vmatpush1.msra.mxu0 %v40
  %76 = vmatprep.subr.mxu0 0.0
  %77 = vmatpush1.msra.mxu0 %v41
  %78 = vmatprep.subr.mxu0 0.0
  %79 = vmatpush1.msra.mxu0 0.0
  %80 = vmatprep.subr.mxu0 0.0
  %81 = vmatpush1.msra.mxu0 0.0
  %82 = vmatprep.subr.mxu0 0.0
  %83 = vmatpush1.msra.mxu0 0.0
  %84 = vmatprep.subr.mxu0 0.0
  %85 = vmatpush1.msra.mxu0 0.0
  %86 = vmatprep.subr.mxu0 0.0
  %87 = vmatpush1.msra.mxu0 0.0
  %88 = vmatprep.subr.mxu0 0.0
  %89 = vmatpush1.msra.mxu0 0.0
  %90 = vmatprep.subr.mxu0 0.0
  %91 = vmatpush1.msra.mxu0 0.0
  %92 = vmatprep.subr.mxu0 0.0
  %93 = vmatpush1.msra.mxu0 0.0
  %94 = vmatprep.subr.mxu0 0.0
  %95 = vmatpush1.msra.mxu0 0.0
  %96 = vmatprep.subr.mxu0 0.0
  %97 = vmatpush1.msra.mxu0 0.0
  %98 = vmatprep.subr.mxu0 0.0
  %99 = vmatpush1.msra.mxu0 0.0
  %100 = vmatprep.subr.mxu0 0.0
  %101 = vmatpush1.msra.mxu0 0.0
  %102 = vmatprep.subr.mxu0 0.0
  %103 = vmatpush1.msra.mxu0 0.0
  %104 = vmatprep.subr.mxu0 0.0
  %105 = vmatpush1.msra.mxu0 0.0
  %106 = vmatprep.subr.mxu0 0.0
  %107 = vmatpush1.msra.mxu0 0.0
  %108 = vmatprep.subr.mxu0 0.0
  %109 = vmatpush1.msra.mxu0 0.0
  %110 = vmatprep.subr.mxu0 0.0
  %111 = vmatpush1.msra.mxu0 0.0
  %112 = vmatprep.subr.mxu0 0.0
  %113 = vmatpush1.msra.mxu0 0.0
  %114 = vmatprep.subr.mxu0 0.0
  %115 = vmatpush1.msra.mxu0 0.0
  %116 = vmatprep.subr.mxu0 0.0
  %117 = vmatpush1.msra.mxu0 0.0
  %118 = vmatprep.subr.mxu0 0.0
  %119 = vmatpush1.msra.mxu0 0.0
  %120 = vmatprep.subr.mxu0 0.0
  %121 = vmatpush1.msra.mxu0 0.0
  %122 = vmatprep.subr.mxu0 0.0
  %123 = vmatpush1.msra.mxu0 0.0
  %124 = vmatprep.subr.mxu0 0.0
  %125 = vmatpush1.msra.mxu0 0.0
  %126 = vmatprep.subr.mxu0 0.0
  %127 = vmatpush1.msra.mxu0 0.0
  %128 = vmatprep.subr.mxu0 0.0
  %129 = vmatpush1.msra.mxu0 0.0
  %130 = vmatprep.subr.mxu0 0.0
  %131 = vmatpush1.msra.mxu0 0.0
  %132 = vmatprep.subr.mxu0 0.0
  %133 = vmatpush1.msra.mxu0 0.0
  %134 = vmatprep.subr.mxu0 0.0
  %135 = vmatpush1.msra.mxu0 0.0
  %136 = vmatprep.subr.mxu0 0.0
  %137 = vmatpush1.msra.mxu0 0.0
  %138 = vmatprep.mubr.f32.mxu0 0.0
  %139 = vmatmul.mubr.f32.gmra.mrb[0].mxu0 %v51
  %v140 = vpop.f32.mrb[0].mxu0
  %v141 = vadd.f32 %v47, %v140
  %v142 = vpop.f32.mrb[0].mxu0
  %143 = vmatprep.mubr.f32.mxu0 0.0
  %144 = vmatmul.mubr.f32.gmra.mrb[0].mxu0 %v54
  %v145 = vpop.f32.mrb[0].mxu0
  %v146 = vadd.f32 %v47, %v145
  %v147 = vpop.f32.mrb[0].mxu0
  %148 = vmatprep.mubr.f32.mxu0 0.0
  %149 = vmatmul.mubr.f32.gmra.mrb[0].mxu0 %v57
  %v150 = vpop.f32.mrb[0].mxu0
  %v151 = vadd.f32 %v47, %v150
  %v152 = vpop.f32.mrb[0].mxu0
  %153 = vmatprep.mubr.f32.mxu0 0.0
  %154 = vmatmul.mubr.f32.gmra.mrb[0].mxu0 %v60
  %v155 = vpop.f32.mrb[0].mxu0
  %v156 = vadd.f32 %v47, %v155
  %v157 = vpop.f32.mrb[0].mxu0
  %158 = vmatprep.mubr.f32.mxu0 0.0
  %159 = vmatmul.mubr.f32.gmra.mrb[0].mxu0 %v63
  %v160 = vpop.f32.mrb[0].mxu0
  %v161 = vadd.f32 %v47, %v160
  %v162 = vpop.f32.mrb[0].mxu0
  %163 = vmatprep.mubr.f32.mxu0 0.0
  %164 = vmatmul.mubr.f32.gmra.mrb[0].mxu0 %v66
  %v165 = vpop.f32.mrb[0].mxu0
  %v166 = vadd.f32 %v47, %v165
  %v167 = vpop.f32.mrb[0].mxu0
  %168 = vmatprep.mubr.f32.mxu0 0.0
  %169 = vmatmul.mubr.f32.gmra.mrb[0].mxu0 %v69
  %v170 = vpop.f32.mrb[0].mxu0
  %v171 = vadd.f32 %v47, %v170
  %v172 = vpop.f32.mrb[0].mxu0
  %173 = vmatprep.mubr.f32.mxu0 0.0
  %174 = vmatmul.mubr.f32.gmra.mrb[0].mxu0 %v72
  %v175 = vpop.f32.mrb[0].mxu0
  %v176 = vadd.f32 %v47, %v175
  %v177 = vpop.f32.mrb[0].mxu0
  %178 = vdwg.mxu0
  %v179 = vld [vmem:[%s2] sm:$0xff]
  %v180 = vld [vmem:[%s2 + $0x8] sm:$0xff]
  %v181 = vld [vmem:[%s2 + $0x10] sm:$0xff]
  %v182 = vld [vmem:[%s2 + $0x18] sm:$0xff]
  %vm183 = vcmask 261120
  %v185 = vsel %vm183, 0.0, 0
  %187 = vmatprep.subr.mxu0 0.0
  %188 = vmatpush1.msra.mxu0 %v179
  %189 = vmatprep.subr.mxu0 0.0
  %190 = vmatpush1.msra.mxu0 %v180
  %191 = vmatprep.subr.mxu0 0.0
  %192 = vmatpush1.msra.mxu0 %v181
  %193 = vmatprep.subr.mxu0 0.0
  %194 = vmatpush1.msra.mxu0 %v182
  %195 = vmatprep.subr.mxu0 0.0
  %196 = vmatpush1.msra.mxu0 0.0
  %197 = vmatprep.subr.mxu0 0.0
  %198 = vmatpush1.msra.mxu0 0.0
  %199 = vmatprep.subr.mxu0 0.0
  %200 = vmatpush1.msra.mxu0 0.0
  %201 = vmatprep.subr.mxu0 0.0
  %202 = vmatpush1.msra.mxu0 0.0
  %203 = vmatprep.subr.mxu0 0.0
  %204 = vmatpush1.msra.mxu0 0.0
  %205 = vmatprep.subr.mxu0 0.0
  %206 = vmatpush1.msra.mxu0 0.0
  %207 = vmatprep.subr.mxu0 0.0
  %208 = vmatpush1.msra.mxu0 0.0
  %209 = vmatprep.subr.mxu0 0.0
  %210 = vmatpush1.msra.mxu0 0.0
  %211 = vmatprep.subr.mxu0 0.0
  %212 = vmatpush1.msra.mxu0 0.0
  %213 = vmatprep.subr.mxu0 0.0
  %214 = vmatpush1.msra.mxu0 0.0
  %215 = vmatprep.subr.mxu0 0.0
  %216 = vmatpush1.msra.mxu0 0.0
  %217 = vmatprep.subr.mxu0 0.0
  %218 = vmatpush1.msra.mxu0 0.0
  %219 = vmatprep.subr.mxu0 0.0
  %220 = vmatpush1.msra.mxu0 0.0
  %221 = vmatprep.subr.mxu0 0.0
  %222 = vmatpush1.msra.mxu0 0.0
  %223 = vmatprep.subr.mxu0 0.0
  %224 = vmatpush1.msra.mxu0 0.0
  %225 = vmatprep.subr.mxu0 0.0
  %226 = vmatpush1.msra.mxu0 0.0
  %227 = vmatprep.subr.mxu0 0.0
  %228 = vmatpush1.msra.mxu0 0.0
  %229 = vmatprep.subr.mxu0 0.0
  %230 = vmatpush1.msra.mxu0 0.0
  %231 = vmatprep.subr.mxu0 0.0
  %232 = vmatpush1.msra.mxu0 0.0
  %233 = vmatprep.subr.mxu0 0.0
  %234 = vmatpush1.msra.mxu0 0.0
  %235 = vmatprep.subr.mxu0 0.0
  %236 = vmatpush1.msra.mxu0 0.0
  %237 = vmatprep.subr.mxu0 0.0
  %238 = vmatpush1.msra.mxu0 0.0
  %239 = vmatprep.subr.mxu0 0.0
  %240 = vmatpush1.msra.mxu0 0.0
  %241 = vmatprep.subr.mxu0 0.0
  %242 = vmatpush1.msra.mxu0 0.0
  %243 = vmatprep.subr.mxu0 0.0
  %244 = vmatpush1.msra.mxu0 0.0
  %245 = vmatprep.subr.mxu0 0.0
  %246 = vmatpush1.msra.mxu0 0.0
  %247 = vmatprep.subr.mxu0 0.0
  %248 = vmatpush1.msra.mxu0 0.0
  %249 = vmatprep.subr.mxu0 0.0
  %250 = vmatpush1.msra.mxu0 0.0
  %251 = vmatprep.mubr.f32.mxu0 0.0
  %252 = vmatmul.mubr.f32.gmra.mrb[0].mxu0 %v185
  %v253 = vpop.f32.mrb[0].mxu0
  %v254 = vadd.f32 0.0, %v253
  %v255 = vpop.f32.mrb[0].mxu0
  %256 = vdwg.mxu0
  %v257 = vadd.f32 %v141, %v254
  %v258 = vxor.u32 %v257, 2147483648
  %v259 = vmul.f32 %v258, 1.442695
  %v260 = vpow.pop %v259
  %v261 = vadd.f32 %v260, 1.0
  %v262 = vrcp.pop %v261
  %v263 = vmul.f32 1.0, %v262
  %v264 = vtanh.pop %v257
  %v265 = vmul.f32 %v263, 0.0
  %267 = vrot.lane.b32.xlu0 %v264, 64
  %v268 = vpop.permute.xlu0 %267
  %v270 = vmul.f32 %v263, %v268
  %272 = vrot.lane.b32.xlu0 %v270, 32
  %v273 = vpop.permute.xlu0 %272
  %v275 = vadd.f32 %v265, %v273
  %v276 = vtanh.pop %v275
  %278 = vrot.lane.b32.xlu0 %v276, 64
  %v279 = vpop.permute.xlu0 %278
  %v281 = vmul.f32 %v263, %v279
  %283 = vrot.lane.b32.xlu0 %v281, 32
  %v284 = vpop.permute.xlu0 %283
  %v285 = vsel %vm183, %v284, 0
  %287 = vmatprep.subr.mxu0 0.0
  %288 = vmatpush1.msra.mxu0 %v179
  %289 = vmatprep.subr.mxu0 0.0
  %290 = vmatpush1.msra.mxu0 %v180
  %291 = vmatprep.subr.mxu0 0.0
  %292 = vmatpush1.msra.mxu0 %v181
  %293 = vmatprep.subr.mxu0 0.0
  %294 = vmatpush1.msra.mxu0 %v182
  %295 = vmatprep.subr.mxu0 0.0
  %296 = vmatpush1.msra.mxu0 0.0
  %297 = vmatprep.subr.mxu0 0.0
  %298 = vmatpush1.msra.mxu0 0.0
  %299 = vmatprep.subr.mxu0 0.0
  %300 = vmatpush1.msra.mxu0 0.0
  %301 = vmatprep.subr.mxu0 0.0
  %302 = vmatpush1.msra.mxu0 0.0
  %303 = vmatprep.subr.mxu0 0.0
  %304 = vmatpush1.msra.mxu0 0.0
  %305 = vmatprep.subr.mxu0 0.0
  %306 = vmatpush1.msra.mxu0 0.0
  %307 = vmatprep.subr.mxu0 0.0
  %308 = vmatpush1.msra.mxu0 0.0
  %309 = vmatprep.subr.mxu0 0.0
  %310 = vmatpush1.msra.mxu0 0.0
  %311 = vmatprep.subr.mxu0 0.0
  %312 = vmatpush1.msra.mxu0 0.0
  %313 = vmatprep.subr.mxu0 0.0
  %314 = vmatpush1.msra.mxu0 0.0
  %315 = vmatprep.subr.mxu0 0.0
  %316 = vmatpush1.msra.mxu0 0.0
  %317 = vmatprep.subr.mxu0 0.0
  %318 = vmatpush1.msra.mxu0 0.0
  %319 = vmatprep.subr.mxu0 0.0
  %320 = vmatpush1.msra.mxu0 0.0
  %321 = vmatprep.subr.mxu0 0.0
  %322 = vmatpush1.msra.mxu0 0.0
  %323 = vmatprep.subr.mxu0 0.0
  %324 = vmatpush1.msra.mxu0 0.0
  %325 = vmatprep.subr.mxu0 0.0
  %326 = vmatpush1.msra.mxu0 0.0
  %327 = vmatprep.subr.mxu0 0.0
  %328 = vmatpush1.msra.mxu0 0.0
  %329 = vmatprep.subr.mxu0 0.0
  %330 = vmatpush1.msra.mxu0 0.0
  %331 = vmatprep.subr.mxu0 0.0
  %332 = vmatpush1.msra.mxu0 0.0
  %333 = vmatprep.subr.mxu0 0.0
  %334 = vmatpush1.msra.mxu0 0.0
  %335 = vmatprep.subr.mxu0 0.0
  %336 = vmatpush1.msra.mxu0 0.0
  %337 = vmatprep.subr.mxu0 0.0
  %338 = vmatpush1.msra.mxu0 0.0
  %339 = vmatprep.subr.mxu0 0.0
  %340 = vmatpush1.msra.mxu0 0.0
  %341 = vmatprep.subr.mxu0 0.0
  %342 = vmatpush1.msra.mxu0 0.0
  %343 = vmatprep.subr.mxu0 0.0
  %344 = vmatpush1.msra.mxu0 0.0
  %345 = vmatprep.subr.mxu0 0.0
  %346 = vmatpush1.msra.mxu0 0.0
  %347 = vmatprep.subr.mxu0 0.0
  %348 = vmatpush1.msra.mxu0 0.0
  %349 = vmatprep.subr.mxu0 0.0
  %350 = vmatpush1.msra.mxu0 0.0
  %351 = vmatprep.mubr.f32.mxu0 0.0
  %352 = vmatmul.mubr.f32.gmra.mrb[0].mxu0 %v285
  %v353 = vpop.f32.mrb[0].mxu0
  %v354 = vadd.f32 0.0, %v353
  %v355 = vpop.f32.mrb[0].mxu0
  %356 = vdwg.mxu0
  %v357 = vadd.f32 %v146, %v354
  %v358 = vxor.u32 %v357, 2147483648
  %v359 = vmul.f32 %v358, 1.442695
  %v360 = vpow.pop %v359
  %v361 = vadd.f32 %v360, 1.0
  %v362 = vrcp.pop %v361
  %v363 = vmul.f32 1.0, %v362
  %v364 = vtanh.pop %v357
  %v365 = vmul.f32 %v363, %v275
  %367 = vrot.lane.b32.xlu0 %v364, 64
  %v368 = vpop.permute.xlu0 %367
  %v370 = vmul.f32 %v363, %v368
  %372 = vrot.lane.b32.xlu0 %v370, 32
  %v373 = vpop.permute.xlu0 %372
  %v375 = vadd.f32 %v365, %v373
  %v376 = vtanh.pop %v375
  %378 = vrot.lane.b32.xlu0 %v376, 64
  %v379 = vpop.permute.xlu0 %378
  %v381 = vmul.f32 %v363, %v379
  %383 = vrot.lane.b32.xlu0 %v381, 32
  %v384 = vpop.permute.xlu0 %383
  %v385 = vsel %vm183, %v384, 0
  %387 = vmatprep.subr.mxu0 0.0
  %388 = vmatpush1.msra.mxu0 %v179
  %389 = vmatprep.subr.mxu0 0.0
  %390 = vmatpush1.msra.mxu0 %v180
  %391 = vmatprep.subr.mxu0 0.0
  %392 = vmatpush1.msra.mxu0 %v181
  %393 = vmatprep.subr.mxu0 0.0
  %394 = vmatpush1.msra.mxu0 %v182
  %395 = vmatprep.subr.mxu0 0.0
  %396 = vmatpush1.msra.mxu0 0.0
  %397 = vmatprep.subr.mxu0 0.0
  %398 = vmatpush1.msra.mxu0 0.0
  %399 = vmatprep.subr.mxu0 0.0
  %400 = vmatpush1.msra.mxu0 0.0
  %401 = vmatprep.subr.mxu0 0.0
  %402 = vmatpush1.msra.mxu0 0.0
  %403 = vmatprep.subr.mxu0 0.0
  %404 = vmatpush1.msra.mxu0 0.0
  %405 = vmatprep.subr.mxu0 0.0
  %406 = vmatpush1.msra.mxu0 0.0
  %407 = vmatprep.subr.mxu0 0.0
  %408 = vmatpush1.msra.mxu0 0.0
  %409 = vmatprep.subr.mxu0 0.0
  %410 = vmatpush1.msra.mxu0 0.0
  %411 = vmatprep.subr.mxu0 0.0
  %412 = vmatpush1.msra.mxu0 0.0
  %413 = vmatprep.subr.mxu0 0.0
  %414 = vmatpush1.msra.mxu0 0.0
  %415 = vmatprep.subr.mxu0 0.0
  %416 = vmatpush1.msra.mxu0 0.0
  %417 = vmatprep.subr.mxu0 0.0
  %418 = vmatpush1.msra.mxu0 0.0
  %419 = vmatprep.subr.mxu0 0.0
  %420 = vmatpush1.msra.mxu0 0.0
  %421 = vmatprep.subr.mxu0 0.0
  %422 = vmatpush1.msra.mxu0 0.0
  %423 = vmatprep.subr.mxu0 0.0
  %424 = vmatpush1.msra.mxu0 0.0
  %425 = vmatprep.subr.mxu0 0.0
  %426 = vmatpush1.msra.mxu0 0.0
  %427 = vmatprep.subr.mxu0 0.0
  %428 = vmatpush1.msra.mxu0 0.0
  %429 = vmatprep.subr.mxu0 0.0
  %430 = vmatpush1.msra.mxu0 0.0
  %431 = vmatprep.subr.mxu0 0.0
  %432 = vmatpush1.msra.mxu0 0.0
  %433 = vmatprep.subr.mxu0 0.0
  %434 = vmatpush1.msra.mxu0 0.0
  %435 = vmatprep.subr.mxu0 0.0
  %436 = vmatpush1.msra.mxu0 0.0
  %437 = vmatprep.subr.mxu0 0.0
  %438 = vmatpush1.msra.mxu0 0.0
  %439 = vmatprep.subr.mxu0 0.0
  %440 = vmatpush1.msra.mxu0 0.0
  %441 = vmatprep.subr.mxu0 0.0
  %442 = vmatpush1.msra.mxu0 0.0
  %443 = vmatprep.subr.mxu0 0.0
  %444 = vmatpush1.msra.mxu0 0.0
  %445 = vmatprep.subr.mxu0 0.0
  %446 = vmatpush1.msra.mxu0 0.0
  %447 = vmatprep.subr.mxu0 0.0
  %448 = vmatpush1.msra.mxu0 0.0
  %449 = vmatprep.subr.mxu0 0.0
  %450 = vmatpush1.msra.mxu0 0.0
  %451 = vmatprep.mubr.f32.mxu0 0.0
  %452 = vmatmul.mubr.f32.gmra.mrb[0].mxu0 %v385
  %v453 = vpop.f32.mrb[0].mxu0
  %v454 = vadd.f32 0.0, %v453
  %v455 = vpop.f32.mrb[0].mxu0
  %456 = vdwg.mxu0
  %v457 = vadd.f32 %v151, %v454
  %v458 = vxor.u32 %v457, 2147483648
  %v459 = vmul.f32 %v458, 1.442695
  %v460 = vpow.pop %v459
  %v461 = vadd.f32 %v460, 1.0
  %v462 = vrcp.pop %v461
  %v463 = vmul.f32 1.0, %v462
  %v464 = vtanh.pop %v457
  %v465 = vmul.f32 %v463, %v375
  %467 = vrot.lane.b32.xlu0 %v464, 64
  %v468 = vpop.permute.xlu0 %467
  %v470 = vmul.f32 %v463, %v468
  %472 = vrot.lane.b32.xlu0 %v470, 32
  %v473 = vpop.permute.xlu0 %472
  %v475 = vadd.f32 %v465, %v473
  %v476 = vtanh.pop %v475
  %478 = vrot.lane.b32.xlu0 %v476, 64
  %v479 = vpop.permute.xlu0 %478
  %v481 = vmul.f32 %v463, %v479
  %483 = vrot.lane.b32.xlu0 %v481, 32
  %v484 = vpop.permute.xlu0 %483
  %v485 = vsel %vm183, %v484, 0
  %487 = vmatprep.subr.mxu0 0.0
  %488 = vmatpush1.msra.mxu0 %v179
  %489 = vmatprep.subr.mxu0 0.0
  %490 = vmatpush1.msra.mxu0 %v180
  %491 = vmatprep.subr.mxu0 0.0
  %492 = vmatpush1.msra.mxu0 %v181
  %493 = vmatprep.subr.mxu0 0.0
  %494 = vmatpush1.msra.mxu0 %v182
  %495 = vmatprep.subr.mxu0 0.0
  %496 = vmatpush1.msra.mxu0 0.0
  %497 = vmatprep.subr.mxu0 0.0
  %498 = vmatpush1.msra.mxu0 0.0
  %499 = vmatprep.subr.mxu0 0.0
  %500 = vmatpush1.msra.mxu0 0.0
  %501 = vmatprep.subr.mxu0 0.0
  %502 = vmatpush1.msra.mxu0 0.0
  %503 = vmatprep.subr.mxu0 0.0
  %504 = vmatpush1.msra.mxu0 0.0
  %505 = vmatprep.subr.mxu0 0.0
  %506 = vmatpush1.msra.mxu0 0.0
  %507 = vmatprep.subr.mxu0 0.0
  %508 = vmatpush1.msra.mxu0 0.0
  %509 = vmatprep.subr.mxu0 0.0
  %510 = vmatpush1.msra.mxu0 0.0
  %511 = vmatprep.subr.mxu0 0.0
  %512 = vmatpush1.msra.mxu0 0.0
  %513 = vmatprep.subr.mxu0 0.0
  %514 = vmatpush1.msra.mxu0 0.0
  %515 = vmatprep.subr.mxu0 0.0
  %516 = vmatpush1.msra.mxu0 0.0
  %517 = vmatprep.subr.mxu0 0.0
  %518 = vmatpush1.msra.mxu0 0.0
  %519 = vmatprep.subr.mxu0 0.0
  %520 = vmatpush1.msra.mxu0 0.0
  %521 = vmatprep.subr.mxu0 0.0
  %522 = vmatpush1.msra.mxu0 0.0
  %523 = vmatprep.subr.mxu0 0.0
  %524 = vmatpush1.msra.mxu0 0.0
  %525 = vmatprep.subr.mxu0 0.0
  %526 = vmatpush1.msra.mxu0 0.0
  %527 = vmatprep.subr.mxu0 0.0
  %528 = vmatpush1.msra.mxu0 0.0
  %529 = vmatprep.subr.mxu0 0.0
  %530 = vmatpush1.msra.mxu0 0.0
  %531 = vmatprep.subr.mxu0 0.0
  %532 = vmatpush1.msra.mxu0 0.0
  %533 = vmatprep.subr.mxu0 0.0
  %534 = vmatpush1.msra.mxu0 0.0
  %535 = vmatprep.subr.mxu0 0.0
  %536 = vmatpush1.msra.mxu0 0.0
  %537 = vmatprep.subr.mxu0 0.0
  %538 = vmatpush1.msra.mxu0 0.0
  %539 = vmatprep.subr.mxu0 0.0
  %540 = vmatpush1.msra.mxu0 0.0
  %541 = vmatprep.subr.mxu0 0.0
  %542 = vmatpush1.msra.mxu0 0.0
  %543 = vmatprep.subr.mxu0 0.0
  %544 = vmatpush1.msra.mxu0 0.0
  %545 = vmatprep.subr.mxu0 0.0
  %546 = vmatpush1.msra.mxu0 0.0
  %547 = vmatprep.subr.mxu0 0.0
  %548 = vmatpush1.msra.mxu0 0.0
  %549 = vmatprep.subr.mxu0 0.0
  %550 = vmatpush1.msra.mxu0 0.0
  %551 = vmatprep.mubr.f32.mxu0 0.0
  %552 = vmatmul.mubr.f32.gmra.mrb[0].mxu0 %v485
  %v553 = vpop.f32.mrb[0].mxu0
  %v554 = vadd.f32 0.0, %v553
  %v555 = vpop.f32.mrb[0].mxu0
  %556 = vdwg.mxu0
  %v557 = vadd.f32 %v156, %v554
  %v558 = vxor.u32 %v557, 2147483648
  %v559 = vmul.f32 %v558, 1.442695
  %v560 = vpow.pop %v559
  %v561 = vadd.f32 %v560, 1.0
  %v562 = vrcp.pop %v561
  %v563 = vmul.f32 1.0, %v562
  %v564 = vtanh.pop %v557
  %v565 = vmul.f32 %v563, %v475
  %567 = vrot.lane.b32.xlu0 %v564, 64
  %v568 = vpop.permute.xlu0 %567
  %v570 = vmul.f32 %v563, %v568
  %572 = vrot.lane.b32.xlu0 %v570, 32
  %v573 = vpop.permute.xlu0 %572
  %v575 = vadd.f32 %v565, %v573
  %v576 = vtanh.pop %v575
  %578 = vrot.lane.b32.xlu0 %v576, 64
  %v579 = vpop.permute.xlu0 %578
  %v581 = vmul.f32 %v563, %v579
  %583 = vrot.lane.b32.xlu0 %v581, 32
  %v584 = vpop.permute.xlu0 %583
  %v585 = vsel %vm183, %v584, 0
  %587 = vmatprep.subr.mxu0 0.0
  %588 = vmatpush1.msra.mxu0 %v179
  %589 = vmatprep.subr.mxu0 0.0
  %590 = vmatpush1.msra.mxu0 %v180
  %591 = vmatprep.subr.mxu0 0.0
  %592 = vmatpush1.msra.mxu0 %v181
  %593 = vmatprep.subr.mxu0 0.0
  %594 = vmatpush1.msra.mxu0 %v182
  %595 = vmatprep.subr.mxu0 0.0
  %596 = vmatpush1.msra.mxu0 0.0
  %597 = vmatprep.subr.mxu0 0.0
  %598 = vmatpush1.msra.mxu0 0.0
  %599 = vmatprep.subr.mxu0 0.0
  %600 = vmatpush1.msra.mxu0 0.0
  %601 = vmatprep.subr.mxu0 0.0
  %602 = vmatpush1.msra.mxu0 0.0
  %603 = vmatprep.subr.mxu0 0.0
  %604 = vmatpush1.msra.mxu0 0.0
  %605 = vmatprep.subr.mxu0 0.0
  %606 = vmatpush1.msra.mxu0 0.0
  %607 = vmatprep.subr.mxu0 0.0
  %608 = vmatpush1.msra.mxu0 0.0
  %609 = vmatprep.subr.mxu0 0.0
  %610 = vmatpush1.msra.mxu0 0.0
  %611 = vmatprep.subr.mxu0 0.0
  %612 = vmatpush1.msra.mxu0 0.0
  %613 = vmatprep.subr.mxu0 0.0
  %614 = vmatpush1.msra.mxu0 0.0
  %615 = vmatprep.subr.mxu0 0.0
  %616 = vmatpush1.msra.mxu0 0.0
  %617 = vmatprep.subr.mxu0 0.0
  %618 = vmatpush1.msra.mxu0 0.0
  %619 = vmatprep.subr.mxu0 0.0
  %620 = vmatpush1.msra.mxu0 0.0
  %621 = vmatprep.subr.mxu0 0.0
  %622 = vmatpush1.msra.mxu0 0.0
  %623 = vmatprep.subr.mxu0 0.0
  %624 = vmatpush1.msra.mxu0 0.0
  %625 = vmatprep.subr.mxu0 0.0
  %626 = vmatpush1.msra.mxu0 0.0
  %627 = vmatprep.subr.mxu0 0.0
  %628 = vmatpush1.msra.mxu0 0.0
  %629 = vmatprep.subr.mxu0 0.0
  %630 = vmatpush1.msra.mxu0 0.0
  %631 = vmatprep.subr.mxu0 0.0
  %632 = vmatpush1.msra.mxu0 0.0
  %633 = vmatprep.subr.mxu0 0.0
  %634 = vmatpush1.msra.mxu0 0.0
  %635 = vmatprep.subr.mxu0 0.0
  %636 = vmatpush1.msra.mxu0 0.0
  %637 = vmatprep.subr.mxu0 0.0
  %638 = vmatpush1.msra.mxu0 0.0
  %639 = vmatprep.subr.mxu0 0.0
  %640 = vmatpush1.msra.mxu0 0.0
  %641 = vmatprep.subr.mxu0 0.0
  %642 = vmatpush1.msra.mxu0 0.0
  %643 = vmatprep.subr.mxu0 0.0
  %644 = vmatpush1.msra.mxu0 0.0
  %645 = vmatprep.subr.mxu0 0.0
  %646 = vmatpush1.msra.mxu0 0.0
  %647 = vmatprep.subr.mxu0 0.0
  %648 = vmatpush1.msra.mxu0 0.0
  %649 = vmatprep.subr.mxu0 0.0
  %650 = vmatpush1.msra.mxu0 0.0
  %651 = vmatprep.mubr.f32.mxu0 0.0
  %652 = vmatmul.mubr.f32.gmra.mrb[0].mxu0 %v585
  %v653 = vpop.f32.mrb[0].mxu0
  %v654 = vadd.f32 0.0, %v653
  %v655 = vpop.f32.mrb[0].mxu0
  %656 = vdwg.mxu0
  %v657 = vadd.f32 %v161, %v654
  %v658 = vxor.u32 %v657, 2147483648
  %v659 = vmul.f32 %v658, 1.442695
  %v660 = vpow.pop %v659
  %v661 = vadd.f32 %v660, 1.0
  %v662 = vrcp.pop %v661
  %v663 = vmul.f32 1.0, %v662
  %v664 = vtanh.pop %v657
  %v665 = vmul.f32 %v663, %v575
  %667 = vrot.lane.b32.xlu0 %v664, 64
  %v668 = vpop.permute.xlu0 %667
  %v670 = vmul.f32 %v663, %v668
  %672 = vrot.lane.b32.xlu0 %v670, 32
  %v673 = vpop.permute.xlu0 %672
  %v675 = vadd.f32 %v665, %v673
  %v676 = vtanh.pop %v675
  %678 = vrot.lane.b32.xlu0 %v676, 64
  %v679 = vpop.permute.xlu0 %678
  %v681 = vmul.f32 %v663, %v679
  %683 = vrot.lane.b32.xlu0 %v681, 32
  %v684 = vpop.permute.xlu0 %683
  %v685 = vsel %vm183, %v684, 0
  %687 = vmatprep.subr.mxu0 0.0
  %688 = vmatpush1.msra.mxu0 %v179
  %689 = vmatprep.subr.mxu0 0.0
  %690 = vmatpush1.msra.mxu0 %v180
  %691 = vmatprep.subr.mxu0 0.0
  %692 = vmatpush1.msra.mxu0 %v181
  %693 = vmatprep.subr.mxu0 0.0
  %694 = vmatpush1.msra.mxu0 %v182
  %695 = vmatprep.subr.mxu0 0.0
  %696 = vmatpush1.msra.mxu0 0.0
  %697 = vmatprep.subr.mxu0 0.0
  %698 = vmatpush1.msra.mxu0 0.0
  %699 = vmatprep.subr.mxu0 0.0
  %700 = vmatpush1.msra.mxu0 0.0
  %701 = vmatprep.subr.mxu0 0.0
  %702 = vmatpush1.msra.mxu0 0.0
  %703 = vmatprep.subr.mxu0 0.0
  %704 = vmatpush1.msra.mxu0 0.0
  %705 = vmatprep.subr.mxu0 0.0
  %706 = vmatpush1.msra.mxu0 0.0
  %707 = vmatprep.subr.mxu0 0.0
  %708 = vmatpush1.msra.mxu0 0.0
  %709 = vmatprep.subr.mxu0 0.0
  %710 = vmatpush1.msra.mxu0 0.0
  %711 = vmatprep.subr.mxu0 0.0
  %712 = vmatpush1.msra.mxu0 0.0
  %713 = vmatprep.subr.mxu0 0.0
  %714 = vmatpush1.msra.mxu0 0.0
  %715 = vmatprep.subr.mxu0 0.0
  %716 = vmatpush1.msra.mxu0 0.0
  %717 = vmatprep.subr.mxu0 0.0
  %718 = vmatpush1.msra.mxu0 0.0
  %719 = vmatprep.subr.mxu0 0.0
  %720 = vmatpush1.msra.mxu0 0.0
  %721 = vmatprep.subr.mxu0 0.0
  %722 = vmatpush1.msra.mxu0 0.0
  %723 = vmatprep.subr.mxu0 0.0
  %724 = vmatpush1.msra.mxu0 0.0
  %725 = vmatprep.subr.mxu0 0.0
  %726 = vmatpush1.msra.mxu0 0.0
  %727 = vmatprep.subr.mxu0 0.0
  %728 = vmatpush1.msra.mxu0 0.0
  %729 = vmatprep.subr.mxu0 0.0
  %730 = vmatpush1.msra.mxu0 0.0
  %731 = vmatprep.subr.mxu0 0.0
  %732 = vmatpush1.msra.mxu0 0.0
  %733 = vmatprep.subr.mxu0 0.0
  %734 = vmatpush1.msra.mxu0 0.0
  %735 = vmatprep.subr.mxu0 0.0
  %736 = vmatpush1.msra.mxu0 0.0
  %737 = vmatprep.subr.mxu0 0.0
  %738 = vmatpush1.msra.mxu0 0.0
  %739 = vmatprep.subr.mxu0 0.0
  %740 = vmatpush1.msra.mxu0 0.0
  %741 = vmatprep.subr.mxu0 0.0
  %742 = vmatpush1.msra.mxu0 0.0
  %743 = vmatprep.subr.mxu0 0.0
  %744 = vmatpush1.msra.mxu0 0.0
  %745 = vmatprep.subr.mxu0 0.0
  %746 = vmatpush1.msra.mxu0 0.0
  %747 = vmatprep.subr.mxu0 0.0
  %748 = vmatpush1.msra.mxu0 0.0
  %749 = vmatprep.subr.mxu0 0.0
  %750 = vmatpush1.msra.mxu0 0.0
  %751 = vmatprep.mubr.f32.mxu0 0.0
  %752 = vmatmul.mubr.f32.gmra.mrb[0].mxu0 %v685
  %v753 = vpop.f32.mrb[0].mxu0
  %v754 = vadd.f32 0.0, %v753
  %v755 = vpop.f32.mrb[0].mxu0
  %756 = vdwg.mxu0
  %v757 = vadd.f32 %v166, %v754
  %v758 = vxor.u32 %v757, 2147483648
  %v759 = vmul.f32 %v758, 1.442695
  %v760 = vpow.pop %v759
  %v761 = vadd.f32 %v760, 1.0
  %v762 = vrcp.pop %v761
  %v763 = vmul.f32 1.0, %v762
  %v764 = vtanh.pop %v757
  %v765 = vmul.f32 %v763, %v675
  %767 = vrot.lane.b32.xlu0 %v764, 64
  %v768 = vpop.permute.xlu0 %767
  %v770 = vmul.f32 %v763, %v768
  %772 = vrot.lane.b32.xlu0 %v770, 32
  %v773 = vpop.permute.xlu0 %772
  %v775 = vadd.f32 %v765, %v773
  %v776 = vtanh.pop %v775
  %778 = vrot.lane.b32.xlu0 %v776, 64
  %v779 = vpop.permute.xlu0 %778
  %v781 = vmul.f32 %v763, %v779
  %783 = vrot.lane.b32.xlu0 %v781, 32
  %v784 = vpop.permute.xlu0 %783
  %v785 = vsel %vm183, %v784, 0
  %787 = vmatprep.subr.mxu0 0.0
  %788 = vmatpush1.msra.mxu0 %v179
  %789 = vmatprep.subr.mxu0 0.0
  %790 = vmatpush1.msra.mxu0 %v180
  %791 = vmatprep.subr.mxu0 0.0
  %792 = vmatpush1.msra.mxu0 %v181
  %793 = vmatprep.subr.mxu0 0.0
  %794 = vmatpush1.msra.mxu0 %v182
  %795 = vmatprep.subr.mxu0 0.0
  %796 = vmatpush1.msra.mxu0 0.0
  %797 = vmatprep.subr.mxu0 0.0
  %798 = vmatpush1.msra.mxu0 0.0
  %799 = vmatprep.subr.mxu0 0.0
  %800 = vmatpush1.msra.mxu0 0.0
  %801 = vmatprep.subr.mxu0 0.0
  %802 = vmatpush1.msra.mxu0 0.0
  %803 = vmatprep.subr.mxu0 0.0
  %804 = vmatpush1.msra.mxu0 0.0
  %805 = vmatprep.subr.mxu0 0.0
  %806 = vmatpush1.msra.mxu0 0.0
  %807 = vmatprep.subr.mxu0 0.0
  %808 = vmatpush1.msra.mxu0 0.0
  %809 = vmatprep.subr.mxu0 0.0
  %810 = vmatpush1.msra.mxu0 0.0
  %811 = vmatprep.subr.mxu0 0.0
  %812 = vmatpush1.msra.mxu0 0.0
  %813 = vmatprep.subr.mxu0 0.0
  %814 = vmatpush1.msra.mxu0 0.0
  %815 = vmatprep.subr.mxu0 0.0
  %816 = vmatpush1.msra.mxu0 0.0
  %817 = vmatprep.subr.mxu0 0.0
  %818 = vmatpush1.msra.mxu0 0.0
  %819 = vmatprep.subr.mxu0 0.0
  %820 = vmatpush1.msra.mxu0 0.0
  %821 = vmatprep.subr.mxu0 0.0
  %822 = vmatpush1.msra.mxu0 0.0
  %823 = vmatprep.subr.mxu0 0.0
  %824 = vmatpush1.msra.mxu0 0.0
  %825 = vmatprep.subr.mxu0 0.0
  %826 = vmatpush1.msra.mxu0 0.0
  %827 = vmatprep.subr.mxu0 0.0
  %828 = vmatpush1.msra.mxu0 0.0
  %829 = vmatprep.subr.mxu0 0.0
  %830 = vmatpush1.msra.mxu0 0.0
  %831 = vmatprep.subr.mxu0 0.0
  %832 = vmatpush1.msra.mxu0 0.0
  %833 = vmatprep.subr.mxu0 0.0
  %834 = vmatpush1.msra.mxu0 0.0
  %835 = vmatprep.subr.mxu0 0.0
  %836 = vmatpush1.msra.mxu0 0.0
  %837 = vmatprep.subr.mxu0 0.0
  %838 = vmatpush1.msra.mxu0 0.0
  %839 = vmatprep.subr.mxu0 0.0
  %840 = vmatpush1.msra.mxu0 0.0
  %841 = vmatprep.subr.mxu0 0.0
  %842 = vmatpush1.msra.mxu0 0.0
  %843 = vmatprep.subr.mxu0 0.0
  %844 = vmatpush1.msra.mxu0 0.0
  %845 = vmatprep.subr.mxu0 0.0
  %846 = vmatpush1.msra.mxu0 0.0
  %847 = vmatprep.subr.mxu0 0.0
  %848 = vmatpush1.msra.mxu0 0.0
  %849 = vmatprep.subr.mxu0 0.0
  %850 = vmatpush1.msra.mxu0 0.0
  %851 = vmatprep.mubr.f32.mxu0 0.0
  %852 = vmatmul.mubr.f32.gmra.mrb[0].mxu0 %v785
  %v853 = vpop.f32.mrb[0].mxu0
  %v854 = vadd.f32 0.0, %v853
  %v855 = vpop.f32.mrb[0].mxu0
  %856 = vdwg.mxu0
  %v857 = vadd.f32 %v171, %v854
  %v858 = vxor.u32 %v857, 2147483648
  %v859 = vmul.f32 %v858, 1.442695
  %v860 = vpow.pop %v859
  %v861 = vadd.f32 %v860, 1.0
  %v862 = vrcp.pop %v861
  %v863 = vmul.f32 1.0, %v862
  %v864 = vtanh.pop %v857
  %v865 = vmul.f32 %v863, %v775
  %867 = vrot.lane.b32.xlu0 %v864, 64
  %v868 = vpop.permute.xlu0 %867
  %v870 = vmul.f32 %v863, %v868
  %872 = vrot.lane.b32.xlu0 %v870, 32
  %v873 = vpop.permute.xlu0 %872
  %v875 = vadd.f32 %v865, %v873
  %v876 = vtanh.pop %v875
  %878 = vrot.lane.b32.xlu0 %v876, 64
  %v879 = vpop.permute.xlu0 %878
  %v881 = vmul.f32 %v863, %v879
  %883 = vrot.lane.b32.xlu0 %v881, 32
  %v884 = vpop.permute.xlu0 %883
  %v885 = vsel %vm183, %v884, 0
  %887 = vmatprep.subr.mxu0 0.0
  %888 = vmatpush1.msra.mxu0 %v179
  %889 = vmatprep.subr.mxu0 0.0
  %890 = vmatpush1.msra.mxu0 %v180
  %891 = vmatprep.subr.mxu0 0.0
  %892 = vmatpush1.msra.mxu0 %v181
  %893 = vmatprep.subr.mxu0 0.0
  %894 = vmatpush1.msra.mxu0 %v182
  %895 = vmatprep.subr.mxu0 0.0
  %896 = vmatpush1.msra.mxu0 0.0
  %897 = vmatprep.subr.mxu0 0.0
  %898 = vmatpush1.msra.mxu0 0.0
  %899 = vmatprep.subr.mxu0 0.0
  %900 = vmatpush1.msra.mxu0 0.0
  %901 = vmatprep.subr.mxu0 0.0
  %902 = vmatpush1.msra.mxu0 0.0
  %903 = vmatprep.subr.mxu0 0.0
  %904 = vmatpush1.msra.mxu0 0.0
  %905 = vmatprep.subr.mxu0 0.0
  %906 = vmatpush1.msra.mxu0 0.0
  %907 = vmatprep.subr.mxu0 0.0
  %908 = vmatpush1.msra.mxu0 0.0
  %909 = vmatprep.subr.mxu0 0.0
  %910 = vmatpush1.msra.mxu0 0.0
  %911 = vmatprep.subr.mxu0 0.0
  %912 = vmatpush1.msra.mxu0 0.0
  %913 = vmatprep.subr.mxu0 0.0
  %914 = vmatpush1.msra.mxu0 0.0
  %915 = vmatprep.subr.mxu0 0.0
  %916 = vmatpush1.msra.mxu0 0.0
  %917 = vmatprep.subr.mxu0 0.0
  %918 = vmatpush1.msra.mxu0 0.0
  %919 = vmatprep.subr.mxu0 0.0
  %920 = vmatpush1.msra.mxu0 0.0
  %921 = vmatprep.subr.mxu0 0.0
  %922 = vmatpush1.msra.mxu0 0.0
  %923 = vmatprep.subr.mxu0 0.0
  %924 = vmatpush1.msra.mxu0 0.0
  %925 = vmatprep.subr.mxu0 0.0
  %926 = vmatpush1.msra.mxu0 0.0
  %927 = vmatprep.subr.mxu0 0.0
  %928 = vmatpush1.msra.mxu0 0.0
  %929 = vmatprep.subr.mxu0 0.0
  %930 = vmatpush1.msra.mxu0 0.0
  %931 = vmatprep.subr.mxu0 0.0
  %932 = vmatpush1.msra.mxu0 0.0
  %933 = vmatprep.subr.mxu0 0.0
  %934 = vmatpush1.msra.mxu0 0.0
  %935 = vmatprep.subr.mxu0 0.0
  %936 = vmatpush1.msra.mxu0 0.0
  %937 = vmatprep.subr.mxu0 0.0
  %938 = vmatpush1.msra.mxu0 0.0
  %939 = vmatprep.subr.mxu0 0.0
  %940 = vmatpush1.msra.mxu0 0.0
  %941 = vmatprep.subr.mxu0 0.0
  %942 = vmatpush1.msra.mxu0 0.0
  %943 = vmatprep.subr.mxu0 0.0
  %944 = vmatpush1.msra.mxu0 0.0
  %945 = vmatprep.subr.mxu0 0.0
  %946 = vmatpush1.msra.mxu0 0.0
  %947 = vmatprep.subr.mxu0 0.0
  %948 = vmatpush1.msra.mxu0 0.0
  %949 = vmatprep.subr.mxu0 0.0
  %950 = vmatpush1.msra.mxu0 0.0
  %951 = vmatprep.mubr.f32.mxu0 0.0
  %952 = vmatmul.mubr.f32.gmra.mrb[0].mxu0 %v885
  %v953 = vpop.f32.mrb[0].mxu0
  %v954 = vadd.f32 0.0, %v953
  %v955 = vpop.f32.mrb[0].mxu0
  %956 = vdwg.mxu0
  %v957 = vadd.f32 %v176, %v954
  %v958 = vxor.u32 %v957, 2147483648
  %v959 = vmul.f32 %v958, 1.442695
  %v960 = vpow.pop %v959
  %v961 = vadd.f32 %v960, 1.0
  %v962 = vrcp.pop %v961
  %v963 = vmul.f32 1.0, %v962
  %v964 = vtanh.pop %v957
  %v965 = vmul.f32 %v963, %v875
  %967 = vrot.lane.b32.xlu0 %v964, 64
  %v968 = vpop.permute.xlu0 %967
  %v970 = vmul.f32 %v963, %v968
  %972 = vrot.lane.b32.xlu0 %v970, 32
  %v973 = vpop.permute.xlu0 %972
  %v975 = vadd.f32 %v965, %v973
  %v976 = vtanh.pop %v975
  %978 = vrot.lane.b32.xlu0 %v976, 64
  %v979 = vpop.permute.xlu0 %978
  %v981 = vmul.f32 %v963, %v979
  %v982 = vld [vmem:[%s4] sm:$0xff]
  %v983 = vld [vmem:[%s4 + $0x8] sm:$0xff]
  %v984 = vld [vmem:[%s4 + $0x10] sm:$0xff]
  %v985 = vld [vmem:[%s4 + $0x18] sm:$0xff]
  %v986 = vld [vmem:[%s6] sm:$0x1]
  %v988 = vlaneseq
  %v989 = vshrl.u32 %v988, 7
  %v990 = vsub.s32 0, %v989
  %v991 = vrot.slane %v986, %v990
  %994 = vrot.lane.b32.xlu0 %v981, 32
  %v995 = vpop.permute.xlu0 %994
  %v996 = vsel %vm183, %v995, 0
  %998 = vmatprep.subr.mxu0 0.0
  %999 = vmatpush1.msra.mxu0 %v982
  %1000 = vmatprep.subr.mxu0 0.0
  %1001 = vmatpush1.msra.mxu0 %v983
  %1002 = vmatprep.subr.mxu0 0.0
  %1003 = vmatpush1.msra.mxu0 %v984
  %1004 = vmatprep.subr.mxu0 0.0
  %1005 = vmatpush1.msra.mxu0 %v985
  %1006 = vmatprep.subr.mxu0 0.0
  %1007 = vmatpush1.msra.mxu0 0.0
  %1008 = vmatprep.subr.mxu0 0.0
  %1009 = vmatpush1.msra.mxu0 0.0
  %1010 = vmatprep.subr.mxu0 0.0
  %1011 = vmatpush1.msra.mxu0 0.0
  %1012 = vmatprep.subr.mxu0 0.0
  %1013 = vmatpush1.msra.mxu0 0.0
  %1014 = vmatprep.subr.mxu0 0.0
  %1015 = vmatpush1.msra.mxu0 0.0
  %1016 = vmatprep.subr.mxu0 0.0
  %1017 = vmatpush1.msra.mxu0 0.0
  %1018 = vmatprep.subr.mxu0 0.0
  %1019 = vmatpush1.msra.mxu0 0.0
  %1020 = vmatprep.subr.mxu0 0.0
  %1021 = vmatpush1.msra.mxu0 0.0
  %1022 = vmatprep.subr.mxu0 0.0
  %1023 = vmatpush1.msra.mxu0 0.0
  %1024 = vmatprep.subr.mxu0 0.0
  %1025 = vmatpush1.msra.mxu0 0.0
  %1026 = vmatprep.subr.mxu0 0.0
  %1027 = vmatpush1.msra.mxu0 0.0
  %1028 = vmatprep.subr.mxu0 0.0
  %1029 = vmatpush1.msra.mxu0 0.0
  %1030 = vmatprep.subr.mxu0 0.0
  %1031 = vmatpush1.msra.mxu0 0.0
  %1032 = vmatprep.subr.mxu0 0.0
  %1033 = vmatpush1.msra.mxu0 0.0
  %1034 = vmatprep.subr.mxu0 0.0
  %1035 = vmatpush1.msra.mxu0 0.0
  %1036 = vmatprep.subr.mxu0 0.0
  %1037 = vmatpush1.msra.mxu0 0.0
  %1038 = vmatprep.subr.mxu0 0.0
  %1039 = vmatpush1.msra.mxu0 0.0
  %1040 = vmatprep.subr.mxu0 0.0
  %1041 = vmatpush1.msra.mxu0 0.0
  %1042 = vmatprep.subr.mxu0 0.0
  %1043 = vmatpush1.msra.mxu0 0.0
  %1044 = vmatprep.subr.mxu0 0.0
  %1045 = vmatpush1.msra.mxu0 0.0
  %1046 = vmatprep.subr.mxu0 0.0
  %1047 = vmatpush1.msra.mxu0 0.0
  %1048 = vmatprep.subr.mxu0 0.0
  %1049 = vmatpush1.msra.mxu0 0.0
  %1050 = vmatprep.subr.mxu0 0.0
  %1051 = vmatpush1.msra.mxu0 0.0
  %1052 = vmatprep.subr.mxu0 0.0
  %1053 = vmatpush1.msra.mxu0 0.0
  %1054 = vmatprep.subr.mxu0 0.0
  %1055 = vmatpush1.msra.mxu0 0.0
  %1056 = vmatprep.subr.mxu0 0.0
  %1057 = vmatpush1.msra.mxu0 0.0
  %1058 = vmatprep.subr.mxu0 0.0
  %1059 = vmatpush1.msra.mxu0 0.0
  %1060 = vmatprep.subr.mxu0 0.0
  %1061 = vmatpush1.msra.mxu0 0.0
  %1062 = vmatprep.mubr.f32.mxu0 0.0
  %1063 = vmatmul.mubr.f32.gmra.mrb[0].mxu0 %v285
  %v1064 = vpop.f32.mrb[0].mxu0
  %v1065 = vadd.f32 %v991, %v1064
  %v1066 = vpop.f32.mrb[0].mxu0
  %1067 = vmatprep.mubr.f32.mxu0 0.0
  %1068 = vmatmul.mubr.f32.gmra.mrb[0].mxu0 %v385
  %v1069 = vpop.f32.mrb[0].mxu0
  %v1070 = vadd.f32 %v991, %v1069
  %v1071 = vpop.f32.mrb[0].mxu0
  %1072 = vmatprep.mubr.f32.mxu0 0.0
  %1073 = vmatmul.mubr.f32.gmra.mrb[0].mxu0 %v485
  %v1074 = vpop.f32.mrb[0].mxu0
  %v1075 = vadd.f32 %v991, %v1074
  %v1076 = vpop.f32.mrb[0].mxu0
  %1077 = vmatprep.mubr.f32.mxu0 0.0
  %1078 = vmatmul.mubr.f32.gmra.mrb[0].mxu0 %v585
  %v1079 = vpop.f32.mrb[0].mxu0
  %v1080 = vadd.f32 %v991, %v1079
  %v1081 = vpop.f32.mrb[0].mxu0
  %1082 = vmatprep.mubr.f32.mxu0 0.0
  %1083 = vmatmul.mubr.f32.gmra.mrb[0].mxu0 %v685
  %v1084 = vpop.f32.mrb[0].mxu0
  %v1085 = vadd.f32 %v991, %v1084
  %v1086 = vpop.f32.mrb[0].mxu0
  %1087 = vmatprep.mubr.f32.mxu0 0.0
  %1088 = vmatmul.mubr.f32.gmra.mrb[0].mxu0 %v785
  %v1089 = vpop.f32.mrb[0].mxu0
  %v1090 = vadd.f32 %v991, %v1089
  %v1091 = vpop.f32.mrb[0].mxu0
  %1092 = vmatprep.mubr.f32.mxu0 0.0
  %1093 = vmatmul.mubr.f32.gmra.mrb[0].mxu0 %v885
  %v1094 = vpop.f32.mrb[0].mxu0
  %v1095 = vadd.f32 %v991, %v1094
  %v1096 = vpop.f32.mrb[0].mxu0
  %1097 = vmatprep.mubr.f32.mxu0 0.0
  %1098 = vmatmul.mubr.f32.gmra.mrb[0].mxu0 %v996
  %v1099 = vpop.f32.mrb[0].mxu0
  %v1100 = vadd.f32 %v991, %v1099
  %v1101 = vpop.f32.mrb[0].mxu0
  %1102 = vdwg.mxu0
  %v1103 = vld [vmem:[%s5] sm:$0xff]
  %v1104 = vld [vmem:[%s5 + $0x8] sm:$0xff]
  %v1105 = vld [vmem:[%s5 + $0x10] sm:$0xff]
  %v1106 = vld [vmem:[%s5 + $0x18] sm:$0xff]
  %1107 = vmatprep.subr.mxu0 0.0
  %1108 = vmatpush1.msra.mxu0 %v1103
  %1109 = vmatprep.subr.mxu0 0.0
  %1110 = vmatpush1.msra.mxu0 %v1104
  %1111 = vmatprep.subr.mxu0 0.0
  %1112 = vmatpush1.msra.mxu0 %v1105
  %1113 = vmatprep.subr.mxu0 0.0
  %1114 = vmatpush1.msra.mxu0 %v1106
  %1115 = vmatprep.subr.mxu0 0.0
  %1116 = vmatpush1.msra.mxu0 0.0
  %1117 = vmatprep.subr.mxu0 0.0
  %1118 = vmatpush1.msra.mxu0 0.0
  %1119 = vmatprep.subr.mxu0 0.0
  %1120 = vmatpush1.msra.mxu0 0.0
  %1121 = vmatprep.subr.mxu0 0.0
  %1122 = vmatpush1.msra.mxu0 0.0
  %1123 = vmatprep.subr.mxu0 0.0
  %1124 = vmatpush1.msra.mxu0 0.0
  %1125 = vmatprep.subr.mxu0 0.0
  %1126 = vmatpush1.msra.mxu0 0.0
  %1127 = vmatprep.subr.mxu0 0.0
  %1128 = vmatpush1.msra.mxu0 0.0
  %1129 = vmatprep.subr.mxu0 0.0
  %1130 = vmatpush1.msra.mxu0 0.0
  %1131 = vmatprep.subr.mxu0 0.0
  %1132 = vmatpush1.msra.mxu0 0.0
  %1133 = vmatprep.subr.mxu0 0.0
  %1134 = vmatpush1.msra.mxu0 0.0
  %1135 = vmatprep.subr.mxu0 0.0
  %1136 = vmatpush1.msra.mxu0 0.0
  %1137 = vmatprep.subr.mxu0 0.0
  %1138 = vmatpush1.msra.mxu0 0.0
  %1139 = vmatprep.subr.mxu0 0.0
  %1140 = vmatpush1.msra.mxu0 0.0
  %1141 = vmatprep.subr.mxu0 0.0
  %1142 = vmatpush1.msra.mxu0 0.0
  %1143 = vmatprep.subr.mxu0 0.0
  %1144 = vmatpush1.msra.mxu0 0.0
  %1145 = vmatprep.subr.mxu0 0.0
  %1146 = vmatpush1.msra.mxu0 0.0
  %1147 = vmatprep.subr.mxu0 0.0
  %1148 = vmatpush1.msra.mxu0 0.0
  %1149 = vmatprep.subr.mxu0 0.0
  %1150 = vmatpush1.msra.mxu0 0.0
  %1151 = vmatprep.subr.mxu0 0.0
  %1152 = vmatpush1.msra.mxu0 0.0
  %1153 = vmatprep.subr.mxu0 0.0
  %1154 = vmatpush1.msra.mxu0 0.0
  %1155 = vmatprep.subr.mxu0 0.0
  %1156 = vmatpush1.msra.mxu0 0.0
  %1157 = vmatprep.subr.mxu0 0.0
  %1158 = vmatpush1.msra.mxu0 0.0
  %1159 = vmatprep.subr.mxu0 0.0
  %1160 = vmatpush1.msra.mxu0 0.0
  %1161 = vmatprep.subr.mxu0 0.0
  %1162 = vmatpush1.msra.mxu0 0.0
  %1163 = vmatprep.subr.mxu0 0.0
  %1164 = vmatpush1.msra.mxu0 0.0
  %1165 = vmatprep.subr.mxu0 0.0
  %1166 = vmatpush1.msra.mxu0 0.0
  %1167 = vmatprep.subr.mxu0 0.0
  %1168 = vmatpush1.msra.mxu0 0.0
  %1169 = vmatprep.subr.mxu0 0.0
  %1170 = vmatpush1.msra.mxu0 0.0
  %1171 = vmatprep.mubr.f32.mxu0 0.0
  %1172 = vmatmul.mubr.f32.gmra.mrb[0].mxu0 %v185
  %v1173 = vpop.f32.mrb[0].mxu0
  %v1174 = vadd.f32 0.0, %v1173
  %v1175 = vpop.f32.mrb[0].mxu0
  %1176 = vdwg.mxu0
  %v1177 = vadd.f32 %v1065, %v1174
  %v1178 = vxor.u32 %v1177, 2147483648
  %v1179 = vmul.f32 %v1178, 1.442695
  %v1180 = vpow.pop %v1179
  %v1181 = vadd.f32 %v1180, 1.0
  %v1182 = vrcp.pop %v1181
  %v1183 = vmul.f32 1.0, %v1182
  %v1184 = vtanh.pop %v1177
  %v1185 = vmul.f32 %v1183, 0.0
  %1187 = vrot.lane.b32.xlu0 %v1184, 64
  %v1188 = vpop.permute.xlu0 %1187
  %v1190 = vmul.f32 %v1183, %v1188
  %1192 = vrot.lane.b32.xlu0 %v1190, 32
  %v1193 = vpop.permute.xlu0 %1192
  %v1195 = vadd.f32 %v1185, %v1193
  %v1196 = vtanh.pop %v1195
  %1198 = vrot.lane.b32.xlu0 %v1196, 64
  %v1199 = vpop.permute.xlu0 %1198
  %v1201 = vmul.f32 %v1183, %v1199
  %1203 = vrot.lane.b32.xlu0 %v1201, 32
  %v1204 = vpop.permute.xlu0 %1203
  %v1205 = vsel %vm183, %v1204, 0
  %1207 = vmatprep.subr.mxu0 0.0
  %1208 = vmatpush1.msra.mxu0 %v1103
  %1209 = vmatprep.subr.mxu0 0.0
  %1210 = vmatpush1.msra.mxu0 %v1104
  %1211 = vmatprep.subr.mxu0 0.0
  %1212 = vmatpush1.msra.mxu0 %v1105
  %1213 = vmatprep.subr.mxu0 0.0
  %1214 = vmatpush1.msra.mxu0 %v1106
  %1215 = vmatprep.subr.mxu0 0.0
  %1216 = vmatpush1.msra.mxu0 0.0
  %1217 = vmatprep.subr.mxu0 0.0
  %1218 = vmatpush1.msra.mxu0 0.0
  %1219 = vmatprep.subr.mxu0 0.0
  %1220 = vmatpush1.msra.mxu0 0.0
  %1221 = vmatprep.subr.mxu0 0.0
  %1222 = vmatpush1.msra.mxu0 0.0
  %1223 = vmatprep.subr.mxu0 0.0
  %1224 = vmatpush1.msra.mxu0 0.0
  %1225 = vmatprep.subr.mxu0 0.0
  %1226 = vmatpush1.msra.mxu0 0.0
  %1227 = vmatprep.subr.mxu0 0.0
  %1228 = vmatpush1.msra.mxu0 0.0
  %1229 = vmatprep.subr.mxu0 0.0
  %1230 = vmatpush1.msra.mxu0 0.0
  %1231 = vmatprep.subr.mxu0 0.0
  %1232 = vmatpush1.msra.mxu0 0.0
  %1233 = vmatprep.subr.mxu0 0.0
  %1234 = vmatpush1.msra.mxu0 0.0
  %1235 = vmatprep.subr.mxu0 0.0
  %1236 = vmatpush1.msra.mxu0 0.0
  %1237 = vmatprep.subr.mxu0 0.0
  %1238 = vmatpush1.msra.mxu0 0.0
  %1239 = vmatprep.subr.mxu0 0.0
  %1240 = vmatpush1.msra.mxu0 0.0
  %1241 = vmatprep.subr.mxu0 0.0
  %1242 = vmatpush1.msra.mxu0 0.0
  %1243 = vmatprep.subr.mxu0 0.0
  %1244 = vmatpush1.msra.mxu0 0.0
  %1245 = vmatprep.subr.mxu0 0.0
  %1246 = vmatpush1.msra.mxu0 0.0
  %1247 = vmatprep.subr.mxu0 0.0
  %1248 = vmatpush1.msra.mxu0 0.0
  %1249 = vmatprep.subr.mxu0 0.0
  %1250 = vmatpush1.msra.mxu0 0.0
  %1251 = vmatprep.subr.mxu0 0.0
  %1252 = vmatpush1.msra.mxu0 0.0
  %1253 = vmatprep.subr.mxu0 0.0
  %1254 = vmatpush1.msra.mxu0 0.0
  %1255 = vmatprep.subr.mxu0 0.0
  %1256 = vmatpush1.msra.mxu0 0.0
  %1257 = vmatprep.subr.mxu0 0.0
  %1258 = vmatpush1.msra.mxu0 0.0
  %1259 = vmatprep.subr.mxu0 0.0
  %1260 = vmatpush1.msra.mxu0 0.0
  %1261 = vmatprep.subr.mxu0 0.0
  %1262 = vmatpush1.msra.mxu0 0.0
  %1263 = vmatprep.subr.mxu0 0.0
  %1264 = vmatpush1.msra.mxu0 0.0
  %1265 = vmatprep.subr.mxu0 0.0
  %1266 = vmatpush1.msra.mxu0 0.0
  %1267 = vmatprep.subr.mxu0 0.0
  %1268 = vmatpush1.msra.mxu0 0.0
  %1269 = vmatprep.subr.mxu0 0.0
  %1270 = vmatpush1.msra.mxu0 0.0
  %1271 = vmatprep.mubr.f32.mxu0 0.0
  %1272 = vmatmul.mubr.f32.gmra.mrb[0].mxu0 %v1205
  %v1273 = vpop.f32.mrb[0].mxu0
  %v1274 = vadd.f32 0.0, %v1273
  %v1275 = vpop.f32.mrb[0].mxu0
  %1276 = vdwg.mxu0
  %v1277 = vadd.f32 %v1070, %v1274
  %v1278 = vxor.u32 %v1277, 2147483648
  %v1279 = vmul.f32 %v1278, 1.442695
  %v1280 = vpow.pop %v1279
  %v1281 = vadd.f32 %v1280, 1.0
  %v1282 = vrcp.pop %v1281
  %v1283 = vmul.f32 1.0, %v1282
  %v1284 = vtanh.pop %v1277
  %v1285 = vmul.f32 %v1283, %v1195
  %1287 = vrot.lane.b32.xlu0 %v1284, 64
  %v1288 = vpop.permute.xlu0 %1287
  %v1290 = vmul.f32 %v1283, %v1288
  %1292 = vrot.lane.b32.xlu0 %v1290, 32
  %v1293 = vpop.permute.xlu0 %1292
  %v1295 = vadd.f32 %v1285, %v1293
  %v1296 = vtanh.pop %v1295
  %1298 = vrot.lane.b32.xlu0 %v1296, 64
  %v1299 = vpop.permute.xlu0 %1298
  %v1301 = vmul.f32 %v1283, %v1299
  %1303 = vrot.lane.b32.xlu0 %v1301, 32
  %v1304 = vpop.permute.xlu0 %1303
  %v1305 = vsel %vm183, %v1304, 0
  %1307 = vmatprep.subr.mxu0 0.0
  %1308 = vmatpush1.msra.mxu0 %v1103
  %1309 = vmatprep.subr.mxu0 0.0
  %1310 = vmatpush1.msra.mxu0 %v1104
  %1311 = vmatprep.subr.mxu0 0.0
  %1312 = vmatpush1.msra.mxu0 %v1105
  %1313 = vmatprep.subr.mxu0 0.0
  %1314 = vmatpush1.msra.mxu0 %v1106
  %1315 = vmatprep.subr.mxu0 0.0
  %1316 = vmatpush1.msra.mxu0 0.0
  %1317 = vmatprep.subr.mxu0 0.0
  %1318 = vmatpush1.msra.mxu0 0.0
  %1319 = vmatprep.subr.mxu0 0.0
  %1320 = vmatpush1.msra.mxu0 0.0
  %1321 = vmatprep.subr.mxu0 0.0
  %1322 = vmatpush1.msra.mxu0 0.0
  %1323 = vmatprep.subr.mxu0 0.0
  %1324 = vmatpush1.msra.mxu0 0.0
  %1325 = vmatprep.subr.mxu0 0.0
  %1326 = vmatpush1.msra.mxu0 0.0
  %1327 = vmatprep.subr.mxu0 0.0
  %1328 = vmatpush1.msra.mxu0 0.0
  %1329 = vmatprep.subr.mxu0 0.0
  %1330 = vmatpush1.msra.mxu0 0.0
  %1331 = vmatprep.subr.mxu0 0.0
  %1332 = vmatpush1.msra.mxu0 0.0
  %1333 = vmatprep.subr.mxu0 0.0
  %1334 = vmatpush1.msra.mxu0 0.0
  %1335 = vmatprep.subr.mxu0 0.0
  %1336 = vmatpush1.msra.mxu0 0.0
  %1337 = vmatprep.subr.mxu0 0.0
  %1338 = vmatpush1.msra.mxu0 0.0
  %1339 = vmatprep.subr.mxu0 0.0
  %1340 = vmatpush1.msra.mxu0 0.0
  %1341 = vmatprep.subr.mxu0 0.0
  %1342 = vmatpush1.msra.mxu0 0.0
  %1343 = vmatprep.subr.mxu0 0.0
  %1344 = vmatpush1.msra.mxu0 0.0
  %1345 = vmatprep.subr.mxu0 0.0
  %1346 = vmatpush1.msra.mxu0 0.0
  %1347 = vmatprep.subr.mxu0 0.0
  %1348 = vmatpush1.msra.mxu0 0.0
  %1349 = vmatprep.subr.mxu0 0.0
  %1350 = vmatpush1.msra.mxu0 0.0
  %1351 = vmatprep.subr.mxu0 0.0
  %1352 = vmatpush1.msra.mxu0 0.0
  %1353 = vmatprep.subr.mxu0 0.0
  %1354 = vmatpush1.msra.mxu0 0.0
  %1355 = vmatprep.subr.mxu0 0.0
  %1356 = vmatpush1.msra.mxu0 0.0
  %1357 = vmatprep.subr.mxu0 0.0
  %1358 = vmatpush1.msra.mxu0 0.0
  %1359 = vmatprep.subr.mxu0 0.0
  %1360 = vmatpush1.msra.mxu0 0.0
  %1361 = vmatprep.subr.mxu0 0.0
  %1362 = vmatpush1.msra.mxu0 0.0
  %1363 = vmatprep.subr.mxu0 0.0
  %1364 = vmatpush1.msra.mxu0 0.0
  %1365 = vmatprep.subr.mxu0 0.0
  %1366 = vmatpush1.msra.mxu0 0.0
  %1367 = vmatprep.subr.mxu0 0.0
  %1368 = vmatpush1.msra.mxu0 0.0
  %1369 = vmatprep.subr.mxu0 0.0
  %1370 = vmatpush1.msra.mxu0 0.0
  %1371 = vmatprep.mubr.f32.mxu0 0.0
  %1372 = vmatmul.mubr.f32.gmra.mrb[0].mxu0 %v1305
  %v1373 = vpop.f32.mrb[0].mxu0
  %v1374 = vadd.f32 0.0, %v1373
  %v1375 = vpop.f32.mrb[0].mxu0
  %1376 = vdwg.mxu0
  %v1377 = vadd.f32 %v1075, %v1374
  %v1378 = vxor.u32 %v1377, 2147483648
  %v1379 = vmul.f32 %v1378, 1.442695
  %v1380 = vpow.pop %v1379
  %v1381 = vadd.f32 %v1380, 1.0
  %v1382 = vrcp.pop %v1381
  %v1383 = vmul.f32 1.0, %v1382
  %v1384 = vtanh.pop %v1377
  %v1385 = vmul.f32 %v1383, %v1295
  %1387 = vrot.lane.b32.xlu0 %v1384, 64
  %v1388 = vpop.permute.xlu0 %1387
  %v1390 = vmul.f32 %v1383, %v1388
  %1392 = vrot.lane.b32.xlu0 %v1390, 32
  %v1393 = vpop.permute.xlu0 %1392
  %v1395 = vadd.f32 %v1385, %v1393
  %v1396 = vtanh.pop %v1395
  %1398 = vrot.lane.b32.xlu0 %v1396, 64
  %v1399 = vpop.permute.xlu0 %1398
  %v1401 = vmul.f32 %v1383, %v1399
  %1403 = vrot.lane.b32.xlu0 %v1401, 32
  %v1404 = vpop.permute.xlu0 %1403
  %v1405 = vsel %vm183, %v1404, 0
  %1407 = vmatprep.subr.mxu0 0.0
  %1408 = vmatpush1.msra.mxu0 %v1103
  %1409 = vmatprep.subr.mxu0 0.0
  %1410 = vmatpush1.msra.mxu0 %v1104
  %1411 = vmatprep.subr.mxu0 0.0
  %1412 = vmatpush1.msra.mxu0 %v1105
  %1413 = vmatprep.subr.mxu0 0.0
  %1414 = vmatpush1.msra.mxu0 %v1106
  %1415 = vmatprep.subr.mxu0 0.0
  %1416 = vmatpush1.msra.mxu0 0.0
  %1417 = vmatprep.subr.mxu0 0.0
  %1418 = vmatpush1.msra.mxu0 0.0
  %1419 = vmatprep.subr.mxu0 0.0
  %1420 = vmatpush1.msra.mxu0 0.0
  %1421 = vmatprep.subr.mxu0 0.0
  %1422 = vmatpush1.msra.mxu0 0.0
  %1423 = vmatprep.subr.mxu0 0.0
  %1424 = vmatpush1.msra.mxu0 0.0
  %1425 = vmatprep.subr.mxu0 0.0
  %1426 = vmatpush1.msra.mxu0 0.0
  %1427 = vmatprep.subr.mxu0 0.0
  %1428 = vmatpush1.msra.mxu0 0.0
  %1429 = vmatprep.subr.mxu0 0.0
  %1430 = vmatpush1.msra.mxu0 0.0
  %1431 = vmatprep.subr.mxu0 0.0
  %1432 = vmatpush1.msra.mxu0 0.0
  %1433 = vmatprep.subr.mxu0 0.0
  %1434 = vmatpush1.msra.mxu0 0.0
  %1435 = vmatprep.subr.mxu0 0.0
  %1436 = vmatpush1.msra.mxu0 0.0
  %1437 = vmatprep.subr.mxu0 0.0
  %1438 = vmatpush1.msra.mxu0 0.0
  %1439 = vmatprep.subr.mxu0 0.0
  %1440 = vmatpush1.msra.mxu0 0.0
  %1441 = vmatprep.subr.mxu0 0.0
  %1442 = vmatpush1.msra.mxu0 0.0
  %1443 = vmatprep.subr.mxu0 0.0
  %1444 = vmatpush1.msra.mxu0 0.0
  %1445 = vmatprep.subr.mxu0 0.0
  %1446 = vmatpush1.msra.mxu0 0.0
  %1447 = vmatprep.subr.mxu0 0.0
  %1448 = vmatpush1.msra.mxu0 0.0
  %1449 = vmatprep.subr.mxu0 0.0
  %1450 = vmatpush1.msra.mxu0 0.0
  %1451 = vmatprep.subr.mxu0 0.0
  %1452 = vmatpush1.msra.mxu0 0.0
  %1453 = vmatprep.subr.mxu0 0.0
  %1454 = vmatpush1.msra.mxu0 0.0
  %1455 = vmatprep.subr.mxu0 0.0
  %1456 = vmatpush1.msra.mxu0 0.0
  %1457 = vmatprep.subr.mxu0 0.0
  %1458 = vmatpush1.msra.mxu0 0.0
  %1459 = vmatprep.subr.mxu0 0.0
  %1460 = vmatpush1.msra.mxu0 0.0
  %1461 = vmatprep.subr.mxu0 0.0
  %1462 = vmatpush1.msra.mxu0 0.0
  %1463 = vmatprep.subr.mxu0 0.0
  %1464 = vmatpush1.msra.mxu0 0.0
  %1465 = vmatprep.subr.mxu0 0.0
  %1466 = vmatpush1.msra.mxu0 0.0
  %1467 = vmatprep.subr.mxu0 0.0
  %1468 = vmatpush1.msra.mxu0 0.0
  %1469 = vmatprep.subr.mxu0 0.0
  %1470 = vmatpush1.msra.mxu0 0.0
  %1471 = vmatprep.mubr.f32.mxu0 0.0
  %1472 = vmatmul.mubr.f32.gmra.mrb[0].mxu0 %v1405
  %v1473 = vpop.f32.mrb[0].mxu0
  %v1474 = vadd.f32 0.0, %v1473
  %v1475 = vpop.f32.mrb[0].mxu0
  %1476 = vdwg.mxu0
  %v1477 = vadd.f32 %v1080, %v1474
  %v1478 = vxor.u32 %v1477, 2147483648
  %v1479 = vmul.f32 %v1478, 1.442695
  %v1480 = vpow.pop %v1479
  %v1481 = vadd.f32 %v1480, 1.0
  %v1482 = vrcp.pop %v1481
  %v1483 = vmul.f32 1.0, %v1482
  %v1484 = vtanh.pop %v1477
  %v1485 = vmul.f32 %v1483, %v1395
  %1487 = vrot.lane.b32.xlu0 %v1484, 64
  %v1488 = vpop.permute.xlu0 %1487
  %v1490 = vmul.f32 %v1483, %v1488
  %1492 = vrot.lane.b32.xlu0 %v1490, 32
  %v1493 = vpop.permute.xlu0 %1492
  %v1495 = vadd.f32 %v1485, %v1493
  %v1496 = vtanh.pop %v1495
  %1498 = vrot.lane.b32.xlu0 %v1496, 64
  %v1499 = vpop.permute.xlu0 %1498
  %v1501 = vmul.f32 %v1483, %v1499
  %1503 = vrot.lane.b32.xlu0 %v1501, 32
  %v1504 = vpop.permute.xlu0 %1503
  %v1505 = vsel %vm183, %v1504, 0
  %1507 = vmatprep.subr.mxu0 0.0
  %1508 = vmatpush1.msra.mxu0 %v1103
  %1509 = vmatprep.subr.mxu0 0.0
  %1510 = vmatpush1.msra.mxu0 %v1104
  %1511 = vmatprep.subr.mxu0 0.0
  %1512 = vmatpush1.msra.mxu0 %v1105
  %1513 = vmatprep.subr.mxu0 0.0
  %1514 = vmatpush1.msra.mxu0 %v1106
  %1515 = vmatprep.subr.mxu0 0.0
  %1516 = vmatpush1.msra.mxu0 0.0
  %1517 = vmatprep.subr.mxu0 0.0
  %1518 = vmatpush1.msra.mxu0 0.0
  %1519 = vmatprep.subr.mxu0 0.0
  %1520 = vmatpush1.msra.mxu0 0.0
  %1521 = vmatprep.subr.mxu0 0.0
  %1522 = vmatpush1.msra.mxu0 0.0
  %1523 = vmatprep.subr.mxu0 0.0
  %1524 = vmatpush1.msra.mxu0 0.0
  %1525 = vmatprep.subr.mxu0 0.0
  %1526 = vmatpush1.msra.mxu0 0.0
  %1527 = vmatprep.subr.mxu0 0.0
  %1528 = vmatpush1.msra.mxu0 0.0
  %1529 = vmatprep.subr.mxu0 0.0
  %1530 = vmatpush1.msra.mxu0 0.0
  %1531 = vmatprep.subr.mxu0 0.0
  %1532 = vmatpush1.msra.mxu0 0.0
  %1533 = vmatprep.subr.mxu0 0.0
  %1534 = vmatpush1.msra.mxu0 0.0
  %1535 = vmatprep.subr.mxu0 0.0
  %1536 = vmatpush1.msra.mxu0 0.0
  %1537 = vmatprep.subr.mxu0 0.0
  %1538 = vmatpush1.msra.mxu0 0.0
  %1539 = vmatprep.subr.mxu0 0.0
  %1540 = vmatpush1.msra.mxu0 0.0
  %1541 = vmatprep.subr.mxu0 0.0
  %1542 = vmatpush1.msra.mxu0 0.0
  %1543 = vmatprep.subr.mxu0 0.0
  %1544 = vmatpush1.msra.mxu0 0.0
  %1545 = vmatprep.subr.mxu0 0.0
  %1546 = vmatpush1.msra.mxu0 0.0
  %1547 = vmatprep.subr.mxu0 0.0
  %1548 = vmatpush1.msra.mxu0 0.0
  %1549 = vmatprep.subr.mxu0 0.0
  %1550 = vmatpush1.msra.mxu0 0.0
  %1551 = vmatprep.subr.mxu0 0.0
  %1552 = vmatpush1.msra.mxu0 0.0
  %1553 = vmatprep.subr.mxu0 0.0
  %1554 = vmatpush1.msra.mxu0 0.0
  %1555 = vmatprep.subr.mxu0 0.0
  %1556 = vmatpush1.msra.mxu0 0.0
  %1557 = vmatprep.subr.mxu0 0.0
  %1558 = vmatpush1.msra.mxu0 0.0
  %1559 = vmatprep.subr.mxu0 0.0
  %1560 = vmatpush1.msra.mxu0 0.0
  %1561 = vmatprep.subr.mxu0 0.0
  %1562 = vmatpush1.msra.mxu0 0.0
  %1563 = vmatprep.subr.mxu0 0.0
  %1564 = vmatpush1.msra.mxu0 0.0
  %1565 = vmatprep.subr.mxu0 0.0
  %1566 = vmatpush1.msra.mxu0 0.0
  %1567 = vmatprep.subr.mxu0 0.0
  %1568 = vmatpush1.msra.mxu0 0.0
  %1569 = vmatprep.subr.mxu0 0.0
  %1570 = vmatpush1.msra.mxu0 0.0
  %1571 = vmatprep.mubr.f32.mxu0 0.0
  %1572 = vmatmul.mubr.f32.gmra.mrb[0].mxu0 %v1505
  %v1573 = vpop.f32.mrb[0].mxu0
  %v1574 = vadd.f32 0.0, %v1573
  %v1575 = vpop.f32.mrb[0].mxu0
  %1576 = vdwg.mxu0
  %v1577 = vadd.f32 %v1085, %v1574
  %v1578 = vxor.u32 %v1577, 2147483648
  %v1579 = vmul.f32 %v1578, 1.442695
  %v1580 = vpow.pop %v1579
  %v1581 = vadd.f32 %v1580, 1.0
  %v1582 = vrcp.pop %v1581
  %v1583 = vmul.f32 1.0, %v1582
  %v1584 = vtanh.pop %v1577
  %v1585 = vmul.f32 %v1583, %v1495
  %1587 = vrot.lane.b32.xlu0 %v1584, 64
  %v1588 = vpop.permute.xlu0 %1587
  %v1590 = vmul.f32 %v1583, %v1588
  %1592 = vrot.lane.b32.xlu0 %v1590, 32
  %v1593 = vpop.permute.xlu0 %1592
  %v1595 = vadd.f32 %v1585, %v1593
  %v1596 = vtanh.pop %v1595
  %1598 = vrot.lane.b32.xlu0 %v1596, 64
  %v1599 = vpop.permute.xlu0 %1598
  %v1601 = vmul.f32 %v1583, %v1599
  %1603 = vrot.lane.b32.xlu0 %v1601, 32
  %v1604 = vpop.permute.xlu0 %1603
  %v1605 = vsel %vm183, %v1604, 0
  %1607 = vmatprep.subr.mxu0 0.0
  %1608 = vmatpush1.msra.mxu0 %v1103
  %1609 = vmatprep.subr.mxu0 0.0
  %1610 = vmatpush1.msra.mxu0 %v1104
  %1611 = vmatprep.subr.mxu0 0.0
  %1612 = vmatpush1.msra.mxu0 %v1105
  %1613 = vmatprep.subr.mxu0 0.0
  %1614 = vmatpush1.msra.mxu0 %v1106
  %1615 = vmatprep.subr.mxu0 0.0
  %1616 = vmatpush1.msra.mxu0 0.0
  %1617 = vmatprep.subr.mxu0 0.0
  %1618 = vmatpush1.msra.mxu0 0.0
  %1619 = vmatprep.subr.mxu0 0.0
  %1620 = vmatpush1.msra.mxu0 0.0
  %1621 = vmatprep.subr.mxu0 0.0
  %1622 = vmatpush1.msra.mxu0 0.0
  %1623 = vmatprep.subr.mxu0 0.0
  %1624 = vmatpush1.msra.mxu0 0.0
  %1625 = vmatprep.subr.mxu0 0.0
  %1626 = vmatpush1.msra.mxu0 0.0
  %1627 = vmatprep.subr.mxu0 0.0
  %1628 = vmatpush1.msra.mxu0 0.0
  %1629 = vmatprep.subr.mxu0 0.0
  %1630 = vmatpush1.msra.mxu0 0.0
  %1631 = vmatprep.subr.mxu0 0.0
  %1632 = vmatpush1.msra.mxu0 0.0
  %1633 = vmatprep.subr.mxu0 0.0
  %1634 = vmatpush1.msra.mxu0 0.0
  %1635 = vmatprep.subr.mxu0 0.0
  %1636 = vmatpush1.msra.mxu0 0.0
  %1637 = vmatprep.subr.mxu0 0.0
  %1638 = vmatpush1.msra.mxu0 0.0
  %1639 = vmatprep.subr.mxu0 0.0
  %1640 = vmatpush1.msra.mxu0 0.0
  %1641 = vmatprep.subr.mxu0 0.0
  %1642 = vmatpush1.msra.mxu0 0.0
  %1643 = vmatprep.subr.mxu0 0.0
  %1644 = vmatpush1.msra.mxu0 0.0
  %1645 = vmatprep.subr.mxu0 0.0
  %1646 = vmatpush1.msra.mxu0 0.0
  %1647 = vmatprep.subr.mxu0 0.0
  %1648 = vmatpush1.msra.mxu0 0.0
  %1649 = vmatprep.subr.mxu0 0.0
  %1650 = vmatpush1.msra.mxu0 0.0
  %1651 = vmatprep.subr.mxu0 0.0
  %1652 = vmatpush1.msra.mxu0 0.0
  %1653 = vmatprep.subr.mxu0 0.0
  %1654 = vmatpush1.msra.mxu0 0.0
  %1655 = vmatprep.subr.mxu0 0.0
  %1656 = vmatpush1.msra.mxu0 0.0
  %1657 = vmatprep.subr.mxu0 0.0
  %1658 = vmatpush1.msra.mxu0 0.0
  %1659 = vmatprep.subr.mxu0 0.0
  %1660 = vmatpush1.msra.mxu0 0.0
  %1661 = vmatprep.subr.mxu0 0.0
  %1662 = vmatpush1.msra.mxu0 0.0
  %1663 = vmatprep.subr.mxu0 0.0
  %1664 = vmatpush1.msra.mxu0 0.0
  %1665 = vmatprep.subr.mxu0 0.0
  %1666 = vmatpush1.msra.mxu0 0.0
  %1667 = vmatprep.subr.mxu0 0.0
  %1668 = vmatpush1.msra.mxu0 0.0
  %1669 = vmatprep.subr.mxu0 0.0
  %1670 = vmatpush1.msra.mxu0 0.0
  %1671 = vmatprep.mubr.f32.mxu0 0.0
  %1672 = vmatmul.mubr.f32.gmra.mrb[0].mxu0 %v1605
  %v1673 = vpop.f32.mrb[0].mxu0
  %v1674 = vadd.f32 0.0, %v1673
  %v1675 = vpop.f32.mrb[0].mxu0
  %1676 = vdwg.mxu0
  %v1677 = vadd.f32 %v1090, %v1674
  %v1678 = vxor.u32 %v1677, 2147483648
  %v1679 = vmul.f32 %v1678, 1.442695
  %v1680 = vpow.pop %v1679
  %v1681 = vadd.f32 %v1680, 1.0
  %v1682 = vrcp.pop %v1681
  %v1683 = vmul.f32 1.0, %v1682
  %v1684 = vtanh.pop %v1677
  %v1685 = vmul.f32 %v1683, %v1595
  %1687 = vrot.lane.b32.xlu0 %v1684, 64
  %v1688 = vpop.permute.xlu0 %1687
  %v1690 = vmul.f32 %v1683, %v1688
  %1692 = vrot.lane.b32.xlu0 %v1690, 32
  %v1693 = vpop.permute.xlu0 %1692
  %v1695 = vadd.f32 %v1685, %v1693
  %v1696 = vtanh.pop %v1695
  %1698 = vrot.lane.b32.xlu0 %v1696, 64
  %v1699 = vpop.permute.xlu0 %1698
  %v1701 = vmul.f32 %v1683, %v1699
  %1703 = vrot.lane.b32.xlu0 %v1701, 32
  %v1704 = vpop.permute.xlu0 %1703
  %v1705 = vsel %vm183, %v1704, 0
  %1707 = vmatprep.subr.mxu0 0.0
  %1708 = vmatpush1.msra.mxu0 %v1103
  %1709 = vmatprep.subr.mxu0 0.0
  %1710 = vmatpush1.msra.mxu0 %v1104
  %1711 = vmatprep.subr.mxu0 0.0
  %1712 = vmatpush1.msra.mxu0 %v1105
  %1713 = vmatprep.subr.mxu0 0.0
  %1714 = vmatpush1.msra.mxu0 %v1106
  %1715 = vmatprep.subr.mxu0 0.0
  %1716 = vmatpush1.msra.mxu0 0.0
  %1717 = vmatprep.subr.mxu0 0.0
  %1718 = vmatpush1.msra.mxu0 0.0
  %1719 = vmatprep.subr.mxu0 0.0
  %1720 = vmatpush1.msra.mxu0 0.0
  %1721 = vmatprep.subr.mxu0 0.0
  %1722 = vmatpush1.msra.mxu0 0.0
  %1723 = vmatprep.subr.mxu0 0.0
  %1724 = vmatpush1.msra.mxu0 0.0
  %1725 = vmatprep.subr.mxu0 0.0
  %1726 = vmatpush1.msra.mxu0 0.0
  %1727 = vmatprep.subr.mxu0 0.0
  %1728 = vmatpush1.msra.mxu0 0.0
  %1729 = vmatprep.subr.mxu0 0.0
  %1730 = vmatpush1.msra.mxu0 0.0
  %1731 = vmatprep.subr.mxu0 0.0
  %1732 = vmatpush1.msra.mxu0 0.0
  %1733 = vmatprep.subr.mxu0 0.0
  %1734 = vmatpush1.msra.mxu0 0.0
  %1735 = vmatprep.subr.mxu0 0.0
  %1736 = vmatpush1.msra.mxu0 0.0
  %1737 = vmatprep.subr.mxu0 0.0
  %1738 = vmatpush1.msra.mxu0 0.0
  %1739 = vmatprep.subr.mxu0 0.0
  %1740 = vmatpush1.msra.mxu0 0.0
  %1741 = vmatprep.subr.mxu0 0.0
  %1742 = vmatpush1.msra.mxu0 0.0
  %1743 = vmatprep.subr.mxu0 0.0
  %1744 = vmatpush1.msra.mxu0 0.0
  %1745 = vmatprep.subr.mxu0 0.0
  %1746 = vmatpush1.msra.mxu0 0.0
  %1747 = vmatprep.subr.mxu0 0.0
  %1748 = vmatpush1.msra.mxu0 0.0
  %1749 = vmatprep.subr.mxu0 0.0
  %1750 = vmatpush1.msra.mxu0 0.0
  %1751 = vmatprep.subr.mxu0 0.0
  %1752 = vmatpush1.msra.mxu0 0.0
  %1753 = vmatprep.subr.mxu0 0.0
  %1754 = vmatpush1.msra.mxu0 0.0
  %1755 = vmatprep.subr.mxu0 0.0
  %1756 = vmatpush1.msra.mxu0 0.0
  %1757 = vmatprep.subr.mxu0 0.0
  %1758 = vmatpush1.msra.mxu0 0.0
  %1759 = vmatprep.subr.mxu0 0.0
  %1760 = vmatpush1.msra.mxu0 0.0
  %1761 = vmatprep.subr.mxu0 0.0
  %1762 = vmatpush1.msra.mxu0 0.0
  %1763 = vmatprep.subr.mxu0 0.0
  %1764 = vmatpush1.msra.mxu0 0.0
  %1765 = vmatprep.subr.mxu0 0.0
  %1766 = vmatpush1.msra.mxu0 0.0
  %1767 = vmatprep.subr.mxu0 0.0
  %1768 = vmatpush1.msra.mxu0 0.0
  %1769 = vmatprep.subr.mxu0 0.0
  %1770 = vmatpush1.msra.mxu0 0.0
  %1771 = vmatprep.mubr.f32.mxu0 0.0
  %1772 = vmatmul.mubr.f32.gmra.mrb[0].mxu0 %v1705
  %v1773 = vpop.f32.mrb[0].mxu0
  %v1774 = vadd.f32 0.0, %v1773
  %v1775 = vpop.f32.mrb[0].mxu0
  %1776 = vdwg.mxu0
  %v1777 = vadd.f32 %v1095, %v1774
  %v1778 = vxor.u32 %v1777, 2147483648
  %v1779 = vmul.f32 %v1778, 1.442695
  %v1780 = vpow.pop %v1779
  %v1781 = vadd.f32 %v1780, 1.0
  %v1782 = vrcp.pop %v1781
  %v1783 = vmul.f32 1.0, %v1782
  %v1784 = vtanh.pop %v1777
  %v1785 = vmul.f32 %v1783, %v1695
  %1787 = vrot.lane.b32.xlu0 %v1784, 64
  %v1788 = vpop.permute.xlu0 %1787
  %v1790 = vmul.f32 %v1783, %v1788
  %1792 = vrot.lane.b32.xlu0 %v1790, 32
  %v1793 = vpop.permute.xlu0 %1792
  %v1795 = vadd.f32 %v1785, %v1793
  %v1796 = vtanh.pop %v1795
  %1798 = vrot.lane.b32.xlu0 %v1796, 64
  %v1799 = vpop.permute.xlu0 %1798
  %v1801 = vmul.f32 %v1783, %v1799
  %1803 = vrot.lane.b32.xlu0 %v1801, 32
  %v1804 = vpop.permute.xlu0 %1803
  %v1805 = vsel %vm183, %v1804, 0
  %1807 = vmatprep.subr.mxu0 0.0
  %1808 = vmatpush1.msra.mxu0 %v1103
  %1809 = vmatprep.subr.mxu0 0.0
  %1810 = vmatpush1.msra.mxu0 %v1104
  %1811 = vmatprep.subr.mxu0 0.0
  %1812 = vmatpush1.msra.mxu0 %v1105
  %1813 = vmatprep.subr.mxu0 0.0
  %1814 = vmatpush1.msra.mxu0 %v1106
  %1815 = vmatprep.subr.mxu0 0.0
  %1816 = vmatpush1.msra.mxu0 0.0
  %1817 = vmatprep.subr.mxu0 0.0
  %1818 = vmatpush1.msra.mxu0 0.0
  %1819 = vmatprep.subr.mxu0 0.0
  %1820 = vmatpush1.msra.mxu0 0.0
  %1821 = vmatprep.subr.mxu0 0.0
  %1822 = vmatpush1.msra.mxu0 0.0
  %1823 = vmatprep.subr.mxu0 0.0
  %1824 = vmatpush1.msra.mxu0 0.0
  %1825 = vmatprep.subr.mxu0 0.0
  %1826 = vmatpush1.msra.mxu0 0.0
  %1827 = vmatprep.subr.mxu0 0.0
  %1828 = vmatpush1.msra.mxu0 0.0
  %1829 = vmatprep.subr.mxu0 0.0
  %1830 = vmatpush1.msra.mxu0 0.0
  %1831 = vmatprep.subr.mxu0 0.0
  %1832 = vmatpush1.msra.mxu0 0.0
  %1833 = vmatprep.subr.mxu0 0.0
  %1834 = vmatpush1.msra.mxu0 0.0
  %1835 = vmatprep.subr.mxu0 0.0
  %1836 = vmatpush1.msra.mxu0 0.0
  %1837 = vmatprep.subr.mxu0 0.0
  %1838 = vmatpush1.msra.mxu0 0.0
  %1839 = vmatprep.subr.mxu0 0.0
  %1840 = vmatpush1.msra.mxu0 0.0
  %1841 = vmatprep.subr.mxu0 0.0
  %1842 = vmatpush1.msra.mxu0 0.0
  %1843 = vmatprep.subr.mxu0 0.0
  %1844 = vmatpush1.msra.mxu0 0.0
  %1845 = vmatprep.subr.mxu0 0.0
  %1846 = vmatpush1.msra.mxu0 0.0
  %1847 = vmatprep.subr.mxu0 0.0
  %1848 = vmatpush1.msra.mxu0 0.0
  %1849 = vmatprep.subr.mxu0 0.0
  %1850 = vmatpush1.msra.mxu0 0.0
  %1851 = vmatprep.subr.mxu0 0.0
  %1852 = vmatpush1.msra.mxu0 0.0
  %1853 = vmatprep.subr.mxu0 0.0
  %1854 = vmatpush1.msra.mxu0 0.0
  %1855 = vmatprep.subr.mxu0 0.0
  %1856 = vmatpush1.msra.mxu0 0.0
  %1857 = vmatprep.subr.mxu0 0.0
  %1858 = vmatpush1.msra.mxu0 0.0
  %1859 = vmatprep.subr.mxu0 0.0
  %1860 = vmatpush1.msra.mxu0 0.0
  %1861 = vmatprep.subr.mxu0 0.0
  %1862 = vmatpush1.msra.mxu0 0.0
  %1863 = vmatprep.subr.mxu0 0.0
  %1864 = vmatpush1.msra.mxu0 0.0
  %1865 = vmatprep.subr.mxu0 0.0
  %1866 = vmatpush1.msra.mxu0 0.0
  %1867 = vmatprep.subr.mxu0 0.0
  %1868 = vmatpush1.msra.mxu0 0.0
  %1869 = vmatprep.subr.mxu0 0.0
  %1870 = vmatpush1.msra.mxu0 0.0
  %1871 = vmatprep.mubr.f32.mxu0 0.0
  %1872 = vmatmul.mubr.f32.gmra.mrb[0].mxu0 %v1805
  %v1873 = vpop.f32.mrb[0].mxu0
  %v1874 = vadd.f32 0.0, %v1873
  %v1875 = vpop.f32.mrb[0].mxu0
  %1876 = vdwg.mxu0
  %v1877 = vadd.f32 %v1100, %v1874
  %v1878 = vxor.u32 %v1877, 2147483648
  %v1879 = vmul.f32 %v1878, 1.442695
  %v1880 = vpow.pop %v1879
  %v1881 = vadd.f32 %v1880, 1.0
  %v1882 = vrcp.pop %v1881
  %v1883 = vmul.f32 1.0, %v1882
  %v1884 = vtanh.pop %v1877
  %v1885 = vmul.f32 %v1883, %v1795
  %1887 = vrot.lane.b32.xlu0 %v1884, 64
  %v1888 = vpop.permute.xlu0 %1887
  %v1890 = vmul.f32 %v1883, %v1888
  %1892 = vrot.lane.b32.xlu0 %v1890, 32
  %v1893 = vpop.permute.xlu0 %1892
  %v1895 = vadd.f32 %v1885, %v1893
  %v1896 = vtanh.pop %v1895
  %1898 = vrot.lane.b32.xlu0 %v1896, 64
  %v1899 = vpop.permute.xlu0 %1898
  %v1901 = vmul.f32 %v1883, %v1899
  %v1902 = vld [vmem:[%s7] sm:$0xff]
  %v1903 = vld [vmem:[%s7 + $0x8] sm:$0xff]
  %v1904 = vld [vmem:[%s7 + $0x10] sm:$0xff]
  %v1905 = vld [vmem:[%s7 + $0x18] sm:$0xff]
  %v1906 = vld [vmem:[%s8] sm:$0x1]
  %v1908 = vlaneseq
  %v1909 = vshrl.u32 %v1908, 7
  %v1910 = vsub.s32 0, %v1909
  %v1911 = vrot.slane %v1906, %v1910
  %1914 = vrot.lane.b32.xlu0 %v1901, 32
  %v1915 = vpop.permute.xlu0 %1914
  %v1916 = vsel %vm183, %v1915, 0
  %1918 = vmatprep.subr.mxu0 0.0
  %1919 = vmatpush1.msra.mxu0 %v1902
  %1920 = vmatprep.subr.mxu0 0.0
  %1921 = vmatpush1.msra.mxu0 %v1903
  %1922 = vmatprep.subr.mxu0 0.0
  %1923 = vmatpush1.msra.mxu0 %v1904
  %1924 = vmatprep.subr.mxu0 0.0
  %1925 = vmatpush1.msra.mxu0 %v1905
  %1926 = vmatprep.subr.mxu0 0.0
  %1927 = vmatpush1.msra.mxu0 0.0
  %1928 = vmatprep.subr.mxu0 0.0
  %1929 = vmatpush1.msra.mxu0 0.0
  %1930 = vmatprep.subr.mxu0 0.0
  %1931 = vmatpush1.msra.mxu0 0.0
  %1932 = vmatprep.subr.mxu0 0.0
  %1933 = vmatpush1.msra.mxu0 0.0
  %1934 = vmatprep.subr.mxu0 0.0
  %1935 = vmatpush1.msra.mxu0 0.0
  %1936 = vmatprep.subr.mxu0 0.0
  %1937 = vmatpush1.msra.mxu0 0.0
  %1938 = vmatprep.subr.mxu0 0.0
  %1939 = vmatpush1.msra.mxu0 0.0
  %1940 = vmatprep.subr.mxu0 0.0
  %1941 = vmatpush1.msra.mxu0 0.0
  %1942 = vmatprep.subr.mxu0 0.0
  %1943 = vmatpush1.msra.mxu0 0.0
  %1944 = vmatprep.subr.mxu0 0.0
  %1945 = vmatpush1.msra.mxu0 0.0
  %1946 = vmatprep.subr.mxu0 0.0
  %1947 = vmatpush1.msra.mxu0 0.0
  %1948 = vmatprep.subr.mxu0 0.0
  %1949 = vmatpush1.msra.mxu0 0.0
  %1950 = vmatprep.subr.mxu0 0.0
  %1951 = vmatpush1.msra.mxu0 0.0
  %1952 = vmatprep.subr.mxu0 0.0
  %1953 = vmatpush1.msra.mxu0 0.0
  %1954 = vmatprep.subr.mxu0 0.0
  %1955 = vmatpush1.msra.mxu0 0.0
  %1956 = vmatprep.subr.mxu0 0.0
  %1957 = vmatpush1.msra.mxu0 0.0
  %1958 = vmatprep.subr.mxu0 0.0
  %1959 = vmatpush1.msra.mxu0 0.0
  %1960 = vmatprep.subr.mxu0 0.0
  %1961 = vmatpush1.msra.mxu0 0.0
  %1962 = vmatprep.subr.mxu0 0.0
  %1963 = vmatpush1.msra.mxu0 0.0
  %1964 = vmatprep.subr.mxu0 0.0
  %1965 = vmatpush1.msra.mxu0 0.0
  %1966 = vmatprep.subr.mxu0 0.0
  %1967 = vmatpush1.msra.mxu0 0.0
  %1968 = vmatprep.subr.mxu0 0.0
  %1969 = vmatpush1.msra.mxu0 0.0
  %1970 = vmatprep.subr.mxu0 0.0
  %1971 = vmatpush1.msra.mxu0 0.0
  %1972 = vmatprep.subr.mxu0 0.0
  %1973 = vmatpush1.msra.mxu0 0.0
  %1974 = vmatprep.subr.mxu0 0.0
  %1975 = vmatpush1.msra.mxu0 0.0
  %1976 = vmatprep.subr.mxu0 0.0
  %1977 = vmatpush1.msra.mxu0 0.0
  %1978 = vmatprep.subr.mxu0 0.0
  %1979 = vmatpush1.msra.mxu0 0.0
  %1980 = vmatprep.subr.mxu0 0.0
  %1981 = vmatpush1.msra.mxu0 0.0
  %1982 = vmatprep.mubr.f32.mxu0 0.0
  %1983 = vmatmul.mubr.f32.gmra.mrb[0].mxu0 %v1916
  %v1984 = vpop.f32.mrb[0].mxu0
  %v1985 = vadd.f32 %v1911, %v1984
  %v1986 = vpop.f32.mrb[0].mxu0
  %1987 = vdwg.mxu0
  %vm1988 = vcmask 31744
  %1989 = vst.msk [vmem:[%s9] sm:$0xff] %vm1988, %v1985
  // Predicated region
  $region38: #{tpu_custom_call.1} parent=0 // pred_check
    _
  $region39: #{tpu_custom_call.1} parent=0 // pred_check_branch
    %1991 = sbr.rel (0) target = $region41
  $region40: #{tpu_custom_call.1} parent=0 // pred_region
    _
  $region41: #{tpu_custom_call.1} parent=0 // pred_fallthru
    _
  // Predicated region
  $region42: #{tpu_custom_call.1} parent=0 // pred_check
    _
  $region43: #{tpu_custom_call.1} parent=0 // pred_check_branch
    %1993 = sbr.rel (0) target = $region45
  $region44: #{tpu_custom_call.1} parent=0 // pred_region
    _
  $region45: #{tpu_custom_call.1} parent=0 // pred_fallthru
    _

</llo_original>
